<compile_context>
chip_gen: v7x
topology: tpu7x:2x2x1
jax: 0.10.0
libtpu: 0.0.40
codegen_flags: <defaults>
</compile_context>

<pallas_src>
import numpy as np
import jax
import jax.numpy as jnp
from jax import lax
from jax.experimental import pallas as pl
from jax.experimental.pallas import tpu as pltpu

EPS = 1e-5
KH = KW = 3   # kernel_size = 3, stride = 1, padding = 1


# --------------------------------------------------------------------------------------
# Pass 1: conv (channel-contraction im2col, one bf16 MXU dot) + per-tile BN partial stats
# --------------------------------------------------------------------------------------
def _conv_stats_kernel(xp_ref, w_ref, y_ref, stats_ref, lhs_ref):
    # xp_ref    : (1, Hp, Wp, Cin)    zero-padded NHWC input tile (bf16)
    # w_ref     : (KH*KW*Cin, Cout)   channel-contraction conv weight (bf16)
    # y_ref     : (1, H*W, Cout)      conv output tile (f32)
    # stats_ref : (1, 2, Cout)        per-tile [sum, sum_of_squares] over the H*W rows (f32)
    # lhs_ref   : (H, W, KH*KW*Cin)   bf16 im2col scratch (every column rewritten each step)
    _, Hp, Wp, Cin = xp_ref.shape
    H, W = Hp - 2, Wp - 2
    K = KH * KW * Cin

    xp = xp_ref[0]                                             # (Hp, Wp, Cin) bf16
    # Build the im2col slab directly in bf16: tap (dy, dx) occupies lanes
    # [(dy*KW+dx)*Cin, +Cin).  For real Cin (>=128) these segment offsets are lane-aligned.
    for dy in range(KH):
        for dx in range(KW):
            k0 = (dy * KW + dx) * Cin
            lhs_ref[:, :, k0:k0 + Cin] = xp[dy:dy + H, dx:dx + W, :]

    # Single MXU contraction over channels*taps; f32 accumulation.
    acc = jnp.dot(lhs_ref[...].reshape(H * W, K), w_ref[...],
                  preferred_element_type=jnp.float32)          # (H*W, Cout) f32
    y_ref[0] = acc.astype(y_ref.dtype)

    # Per-tile BatchNorm partial statistics (lane dim == channel dim -> exact column sums).
    s = jnp.sum(acc, axis=0, keepdims=True)                    # (1, Cout)
    sq = jnp.sum(acc * acc, axis=0, keepdims=True)             # (1, Cout)
    stats_ref[0] = jnp.concatenate([s, sq], axis=0)            # (2, Cout)


# --------------------------------------------------------------------------------------
# Pass 2: per-channel affine (folded BN) + ReLU, in place over the conv output
# --------------------------------------------------------------------------------------
def _bn_relu_kernel(y_ref, scale_ref, shift_ref, o_ref):
    # y_ref/o_ref : (1, H*W, Cout)   scale_ref/shift_ref : (1, Cout)
    o_ref[0] = jnp.maximum(y_ref[0] * scale_ref[...] + shift_ref[...],
                           0.0).astype(o_ref.dtype)


def _vmem_limit_bytes():
    """Per-generation VMEM budget (v5e/v6e: 128 MiB, v7x: 64 MiB physical)."""
    try:
        return int(pltpu.get_tpu_info().vmem_capacity_bytes * 3 // 4)
    except Exception:
        return 32 * 1024 * 1024


@jax.jit
def vgg_block(x_nhwc, w_oihw, gamma, beta):
    """VggBlock forward, channels-last.

    x_nhwc: (N, H, W, Cin) f32, w_oihw: (Cout, Cin, 3, 3) f32.  Returns NHWC (N, H, W, Cout).
    """
    N, H, W, Cin = x_nhwc.shape
    Cout = w_oihw.shape[0]
    Hp, Wp = H + 2, W + 2
    K = KH * KW * Cin

    # One-time layout plumbing: spatial zero-pad + bf16 cast of both conv operands.
    x_pad = jnp.pad(x_nhwc, ((0, 0), (1, 1), (1, 1), (0, 0))).astype(jnp.bfloat16)
    # w_mat[(dy*KW+dx)*Cin + c, o] = w_oihw[o, c, dy, dx]
    w_mat = jnp.transpose(w_oihw, (2, 3, 1, 0)).reshape(K, Cout).astype(jnp.bfloat16)

    cparams = pltpu.CompilerParams(dimension_semantics=("parallel",),
                                   vmem_limit_bytes=_vmem_limit_bytes())

    # ---- pass 1: conv + per-tile stats, batch-parallel grid ----
    y, stats = pl.pallas_call(
        _conv_stats_kernel,
        grid=(N,),
        out_shape=(jax.ShapeDtypeStruct((N, H * W, Cout), jnp.float32),
                   jax.ShapeDtypeStruct((N, 2, Cout), jnp.float32)),
        in_specs=[pl.BlockSpec((1, Hp, Wp, Cin), lambda n: (n, 0, 0, 0)),
                  pl.BlockSpec((K, Cout), lambda n: (0, 0))],
        out_specs=(pl.BlockSpec((1, H * W, Cout), lambda n: (n, 0, 0)),
                   pl.BlockSpec((1, 2, Cout), lambda n: (n, 0, 0))),
        scratch_shapes=[pltpu.VMEM((H, W, K), jnp.bfloat16)],
        compiler_params=cparams,
    )(x_pad, w_mat)

    # ---- tiny, exact-f32 BN folding (no MXU dots on the statistics) ----
    cnt = float(N * H * W)
    ch_sum = jnp.sum(stats[:, 0, :], axis=0)                    # (Cout,)
    ch_sq = jnp.sum(stats[:, 1, :], axis=0)                     # (Cout,)
    mean = ch_sum / cnt
    var = jnp.maximum(ch_sq / cnt - mean * mean, 0.0)           # clamp: no negative variance
    inv_std = lax.rsqrt(var + EPS)
    scale = (gamma * inv_std).reshape(1, Cout)
    shift = (beta - mean * gamma * inv_std).reshape(1, Cout)

    # ---- pass 2: normalize + ReLU, in place over y (input_output_aliases) ----
    out = pl.pallas_call(
        _bn_relu_kernel,
        grid=(N,),
        out_shape=jax.ShapeDtypeStruct((N, H * W, Cout), jnp.float32),
        in_specs=[pl.BlockSpec((1, H * W, Cout), lambda n: (n, 0, 0)),
                  pl.BlockSpec((1, Cout), lambda n: (0, 0)),
                  pl.BlockSpec((1, Cout), lambda n: (0, 0))],
        out_specs=pl.BlockSpec((1, H * W, Cout), lambda n: (n, 0, 0)),
        input_output_aliases={0: 0},
        compiler_params=cparams,
    )(y, scale, shift)

    return out.reshape(N, H, W, Cout)


def vgg_block_reference(x_nchw, w_oihw, gamma, beta, mxu_dtype=None):
    """Pure-JAX reference (conv + training-mode BN + ReLU) in NCHW."""
    xx, ww = x_nchw, w_oihw
    if mxu_dtype is not None:  # emulate bf16 MXU operand rounding, f32 accumulation
        xx = xx.astype(mxu_dtype).astype(jnp.float32)
        ww = ww.astype(mxu_dtype).astype(jnp.float32)
    y = lax.conv_general_dilated(
        xx, ww, window_strides=(1, 1), padding=((1, 1), (1, 1)),
        dimension_numbers=("NCHW", "OIHW", "NCHW"))
    mean = jnp.mean(y, axis=(0, 2, 3), keepdims=True)
    var = jnp.mean((y - mean) ** 2, axis=(0, 2, 3), keepdims=True)
    y = (y - mean) * lax.rsqrt(var + EPS)
    y = y * gamma.reshape(1, -1, 1, 1) + beta.reshape(1, -1, 1, 1)
    return jnp.maximum(y, 0.0)


if __name__ == "__main__":
    N, Cin, Cout, H, W = 2, 4, 8, 16, 16

    key = jax.random.PRNGKey(0)
    k_x, k_w = jax.random.split(key)
    x_nchw = jax.random.normal(k_x, (N, Cin, H, W), jnp.float32)

    # Conv2d weight (kaiming-uniform-like bound), bias=False.
    fan_in = Cin * KH * KW
    bound = 1.0 / np.sqrt(fan_in)
    w = jax.random.uniform(k_w, (Cout, Cin, KH, KW), jnp.float32, -bound, bound)

    # BatchNorm2d default parameter init: weight=1, bias=0.
    gamma = jnp.ones((Cout,), jnp.float32)
    beta = jnp.zeros((Cout,), jnp.float32)

    # Kernel is channels-last native; NCHW <-> NHWC is one-time wrapper-level plumbing.
    x_nhwc = jnp.transpose(x_nchw, (0, 2, 3, 1))
    out_nhwc = jax.block_until_ready(vgg_block(x_nhwc, w, gamma, beta))
    assert out_nhwc.shape == (N, H, W, Cout)

    # Precision-matched reference (bf16 conv operands, f32 accumulation -> tight check).
    ref_bf16 = vgg_block_reference(x_nchw, w, gamma, beta, mxu_dtype=jnp.bfloat16)
    np.testing.assert_allclose(np.asarray(out_nhwc),
                               np.asarray(jnp.transpose(ref_bf16, (0, 2, 3, 1))),
                               rtol=1e-3, atol=1e-3)

    # Full-f32 reference (loose tolerance only accounts for bf16 MXU inputs).
    ref_f32 = vgg_block_reference(x_nchw, w, gamma, beta)
    np.testing.assert_allclose(np.asarray(out_nhwc),
                               np.asarray(jnp.transpose(ref_f32, (0, 2, 3, 1))),
                               rtol=5e-2, atol=5e-2)

    print("KERNEL_OK")
</pallas_src>

<mosaic_0001>
module attributes {stable_mosaic.version = 11 : i64} {
  func.func @_conv_stats_kernel(%arg0: i32, %arg1: memref<1x18x18x4xbf16, #tpu.memory_space<vmem>>, %arg2: memref<36x8xbf16, #tpu.memory_space<vmem>>, %arg3: memref<1x256x8xf32, #tpu.memory_space<vmem>>, %arg4: memref<1x2x8xf32, #tpu.memory_space<vmem>>, %arg5: memref<16x16x36xbf16, #tpu.memory_space<vmem>>) attributes {dimension_semantics = [#tpu.dimension_semantics<parallel>], iteration_bounds = array<i64: 2>, scalar_prefetch = 0 : i64, scratch_operands = 1 : i64, tpu.core_type = #tpu.core_type<tc>, window_params = [{transform_indices = @transform_0, window_bounds = array<i64: 1, 18, 18, 4>}, {pipeline_mode = #tpu.pipeline_mode<synchronous>, transform_indices = @transform_1, window_bounds = array<i64: 36, 8>}, {transform_indices = @transform_2, window_bounds = array<i64: 1, 256, 8>}, {transform_indices = @transform_3, window_bounds = array<i64: 1, 2, 8>}]} {
    %c0 = arith.constant 0 : index
    %c0_0 = arith.constant 0 : index
    %c0_1 = arith.constant 0 : index
    %c0_2 = arith.constant 0 : index
    %0 = vector.load %arg1[%c0, %c0_0, %c0_1, %c0_2] : memref<1x18x18x4xbf16, #tpu.memory_space<vmem>>, vector<1x18x18x4xbf16>
    %1 = vector.shape_cast %0 : vector<1x18x18x4xbf16> to vector<18x18x4xbf16>
    %2 = vector.extract_strided_slice %1 {offsets = [0, 0, 0], sizes = [16, 16, 4], strides = [1, 1, 1]} : vector<18x18x4xbf16> to vector<16x16x4xbf16>
    %c0_3 = arith.constant 0 : index
    %c0_4 = arith.constant 0 : index
    %c0_5 = arith.constant 0 : index
    %3 = vector.load %arg5[%c0_3, %c0_4, %c0_5] : memref<16x16x36xbf16, #tpu.memory_space<vmem>>, vector<16x16x4xbf16>
    tpu.vector_store %arg5[%c0_3, %c0_4, %c0_5], %2 {strides = array<i32>} : memref<16x16x36xbf16, #tpu.memory_space<vmem>>, vector<16x16x4xbf16>,
    %4 = vector.extract_strided_slice %1 {offsets = [0, 1, 0], sizes = [16, 16, 4], strides = [1, 1, 1]} : vector<18x18x4xbf16> to vector<16x16x4xbf16>
    %c0_6 = arith.constant 0 : index
    %c0_7 = arith.constant 0 : index
    %c4 = arith.constant 4 : index
    %5 = vector.load %arg5[%c0_6, %c0_7, %c4] : memref<16x16x36xbf16, #tpu.memory_space<vmem>>, vector<16x16x4xbf16>
    tpu.vector_store %arg5[%c0_6, %c0_7, %c4], %4 {strides = array<i32>} : memref<16x16x36xbf16, #tpu.memory_space<vmem>>, vector<16x16x4xbf16>,
    %6 = vector.extract_strided_slice %1 {offsets = [0, 2, 0], sizes = [16, 16, 4], strides = [1, 1, 1]} : vector<18x18x4xbf16> to vector<16x16x4xbf16>
    %c0_8 = arith.constant 0 : index
    %c0_9 = arith.constant 0 : index
    %c8 = arith.constant 8 : index
    %7 = vector.load %arg5[%c0_8, %c0_9, %c8] : memref<16x16x36xbf16, #tpu.memory_space<vmem>>, vector<16x16x4xbf16>
    tpu.vector_store %arg5[%c0_8, %c0_9, %c8], %6 {strides = array<i32>} : memref<16x16x36xbf16, #tpu.memory_space<vmem>>, vector<16x16x4xbf16>,
    %8 = vector.extract_strided_slice %1 {offsets = [1, 0, 0], sizes = [16, 16, 4], strides = [1, 1, 1]} : vector<18x18x4xbf16> to vector<16x16x4xbf16>
    %c0_10 = arith.constant 0 : index
    %c0_11 = arith.constant 0 : index
    %c12 = arith.constant 12 : index
    %9 = vector.load %arg5[%c0_10, %c0_11, %c12] : memref<16x16x36xbf16, #tpu.memory_space<vmem>>, vector<16x16x4xbf16>
    tpu.vector_store %arg5[%c0_10, %c0_11, %c12], %8 {strides = array<i32>} : memref<16x16x36xbf16, #tpu.memory_space<vmem>>, vector<16x16x4xbf16>,
    %10 = vector.extract_strided_slice %1 {offsets = [1, 1, 0], sizes = [16, 16, 4], strides = [1, 1, 1]} : vector<18x18x4xbf16> to vector<16x16x4xbf16>
    %c0_12 = arith.constant 0 : index
    %c0_13 = arith.constant 0 : index
    %c16 = arith.constant 16 : index
    %11 = vector.load %arg5[%c0_12, %c0_13, %c16] : memref<16x16x36xbf16, #tpu.memory_space<vmem>>, vector<16x16x4xbf16>
    tpu.vector_store %arg5[%c0_12, %c0_13, %c16], %10 {strides = array<i32>} : memref<16x16x36xbf16, #tpu.memory_space<vmem>>, vector<16x16x4xbf16>,
    %12 = vector.extract_strided_slice %1 {offsets = [1, 2, 0], sizes = [16, 16, 4], strides = [1, 1, 1]} : vector<18x18x4xbf16> to vector<16x16x4xbf16>
    %c0_14 = arith.constant 0 : index
    %c0_15 = arith.constant 0 : index
    %c20 = arith.constant 20 : index
    %13 = vector.load %arg5[%c0_14, %c0_15, %c20] : memref<16x16x36xbf16, #tpu.memory_space<vmem>>, vector<16x16x4xbf16>
    tpu.vector_store %arg5[%c0_14, %c0_15, %c20], %12 {strides = array<i32>} : memref<16x16x36xbf16, #tpu.memory_space<vmem>>, vector<16x16x4xbf16>,
    %14 = vector.extract_strided_slice %1 {offsets = [2, 0, 0], sizes = [16, 16, 4], strides = [1, 1, 1]} : vector<18x18x4xbf16> to vector<16x16x4xbf16>
    %c0_16 = arith.constant 0 : index
    %c0_17 = arith.constant 0 : index
    %c24 = arith.constant 24 : index
    %15 = vector.load %arg5[%c0_16, %c0_17, %c24] : memref<16x16x36xbf16, #tpu.memory_space<vmem>>, vector<16x16x4xbf16>
    tpu.vector_store %arg5[%c0_16, %c0_17, %c24], %14 {strides = array<i32>} : memref<16x16x36xbf16, #tpu.memory_space<vmem>>, vector<16x16x4xbf16>,
    %16 = vector.extract_strided_slice %1 {offsets = [2, 1, 0], sizes = [16, 16, 4], strides = [1, 1, 1]} : vector<18x18x4xbf16> to vector<16x16x4xbf16>
    %c0_18 = arith.constant 0 : index
    %c0_19 = arith.constant 0 : index
    %c28 = arith.constant 28 : index
    %17 = vector.load %arg5[%c0_18, %c0_19, %c28] : memref<16x16x36xbf16, #tpu.memory_space<vmem>>, vector<16x16x4xbf16>
    tpu.vector_store %arg5[%c0_18, %c0_19, %c28], %16 {strides = array<i32>} : memref<16x16x36xbf16, #tpu.memory_space<vmem>>, vector<16x16x4xbf16>,
    %18 = vector.extract_strided_slice %1 {offsets = [2, 2, 0], sizes = [16, 16, 4], strides = [1, 1, 1]} : vector<18x18x4xbf16> to vector<16x16x4xbf16>
    %c0_20 = arith.constant 0 : index
    %c0_21 = arith.constant 0 : index
    %c32 = arith.constant 32 : index
    %19 = vector.load %arg5[%c0_20, %c0_21, %c32] : memref<16x16x36xbf16, #tpu.memory_space<vmem>>, vector<16x16x4xbf16>
    tpu.vector_store %arg5[%c0_20, %c0_21, %c32], %18 {strides = array<i32>} : memref<16x16x36xbf16, #tpu.memory_space<vmem>>, vector<16x16x4xbf16>,
    %c0_22 = arith.constant 0 : index
    %c0_23 = arith.constant 0 : index
    %c0_24 = arith.constant 0 : index
    %20 = vector.load %arg5[%c0_22, %c0_23, %c0_24] : memref<16x16x36xbf16, #tpu.memory_space<vmem>>, vector<16x16x36xbf16>
    %21 = vector.shape_cast %20 : vector<16x16x36xbf16> to vector<256x36xbf16>
    %c0_25 = arith.constant 0 : index
    %c0_26 = arith.constant 0 : index
    %22 = vector.load %arg2[%c0_25, %c0_26] : memref<36x8xbf16, #tpu.memory_space<vmem>>, vector<36x8xbf16>
    %cst = arith.constant dense<0.000000e+00> : vector<256x8xf32>
    %23 = tpu.matmul %21, %22, %cst {dimension_numbers = #tpu.dot_dimension_numbers<[1], [0], [0], [1], [0, 0, 1, 1], [], []>} : vector<256x36xbf16>, vector<36x8xbf16>, vector<256x8xf32> -> vector<256x8xf32>
    %c0_27 = arith.constant 0 : index
    %c0_28 = arith.constant 0 : index
    %c0_29 = arith.constant 0 : index
    %24 = vector.load %arg3[%c0_27, %c0_28, %c0_29] : memref<1x256x8xf32, #tpu.memory_space<vmem>>, vector<1x256x8xf32>
    %25 = vector.shape_cast %24 : vector<1x256x8xf32> to vector<256x8xf32>
    %26 = vector.shape_cast %23 : vector<256x8xf32> to vector<1x256x8xf32>
    tpu.vector_store %arg3[%c0_27, %c0_28, %c0_29], %26 {strides = array<i32>} : memref<1x256x8xf32, #tpu.memory_space<vmem>>, vector<1x256x8xf32>,
    %cst_30 = arith.constant dense<0.000000e+00> : vector<8xf32>
    %27 = vector.multi_reduction <add>, %23, %cst_30 [0] : vector<256x8xf32> to vector<8xf32>
    %28 = vector.shape_cast %27 : vector<8xf32> to vector<1x8xf32>
    %29 = arith.mulf %23, %23 : vector<256x8xf32>
    %cst_31 = arith.constant dense<0.000000e+00> : vector<8xf32>
    %30 = vector.multi_reduction <add>, %29, %cst_31 [0] : vector<256x8xf32> to vector<8xf32>
    %31 = vector.shape_cast %30 : vector<8xf32> to vector<1x8xf32>
    %32 = tpu.concatenate %28, %31 in 0 : vector<1x8xf32>, vector<1x8xf32> -> vector<2x8xf32>
    %c0_32 = arith.constant 0 : index
    %c0_33 = arith.constant 0 : index
    %c0_34 = arith.constant 0 : index
    %33 = vector.load %arg4[%c0_32, %c0_33, %c0_34] : memref<1x2x8xf32, #tpu.memory_space<vmem>>, vector<1x2x8xf32>
    %34 = vector.shape_cast %33 : vector<1x2x8xf32> to vector<2x8xf32>
    %35 = vector.shape_cast %32 : vector<2x8xf32> to vector<1x2x8xf32>
    tpu.vector_store %arg4[%c0_32, %c0_33, %c0_34], %35 {strides = array<i32>} : memref<1x2x8xf32, #tpu.memory_space<vmem>>, vector<1x2x8xf32>,
    return
  }
  func.func @transform_0(%arg0: i32) -> (i32, i32, i32, i32) {
    %c0_i32 = arith.constant 0 : i32
    %c0_i32_0 = arith.constant 0 : i32
    %c0_i32_1 = arith.constant 0 : i32
    %c0_i32_2 = arith.constant 0 : i32
    return %arg0, %c0_i32, %c0_i32_0, %c0_i32_1 : i32, i32, i32, i32
  }
  func.func @transform_1(%arg0: i32) -> (i32, i32) {
    %c0_i32 = arith.constant 0 : i32
    %c0_i32_0 = arith.constant 0 : i32
    %c0_i32_1 = arith.constant 0 : i32
    return %c0_i32, %c0_i32_0 : i32, i32
  }
  func.func @transform_2(%arg0: i32) -> (i32, i32, i32) {
    %c0_i32 = arith.constant 0 : i32
    %c0_i32_0 = arith.constant 0 : i32
    %c0_i32_1 = arith.constant 0 : i32
    return %arg0, %c0_i32, %c0_i32_0 : i32, i32, i32
  }
  func.func @transform_3(%arg0: i32) -> (i32, i32, i32) {
    %c0_i32 = arith.constant 0 : i32
    %c0_i32_0 = arith.constant 0 : i32
    %c0_i32_1 = arith.constant 0 : i32
    return %arg0, %c0_i32, %c0_i32_0 : i32, i32, i32
  }
}

module attributes {stable_mosaic.version = 11 : i64} {
  func.func @_bn_relu_kernel(%arg0: i32, %arg1: memref<1x256x8xf32, #tpu.memory_space<vmem>>, %arg2: memref<1x8xf32, #tpu.memory_space<vmem>>, %arg3: memref<1x8xf32, #tpu.memory_space<vmem>>, %arg4: memref<1x256x8xf32, #tpu.memory_space<vmem>>) attributes {dimension_semantics = [#tpu.dimension_semantics<parallel>], iteration_bounds = array<i64: 2>, scalar_prefetch = 0 : i64, scratch_operands = 0 : i64, tpu.core_type = #tpu.core_type<tc>, window_params = [{transform_indices = @transform_0, window_bounds = array<i64: 1, 256, 8>}, {pipeline_mode = #tpu.pipeline_mode<synchronous>, transform_indices = @transform_1, window_bounds = array<i64: 1, 8>}, {pipeline_mode = #tpu.pipeline_mode<synchronous>, transform_indices = @transform_2, window_bounds = array<i64: 1, 8>}, {transform_indices = @transform_3, window_bounds = array<i64: 1, 256, 8>}]} {
    %c0 = arith.constant 0 : index
    %c0_0 = arith.constant 0 : index
    %c0_1 = arith.constant 0 : index
    %0 = vector.load %arg1[%c0, %c0_0, %c0_1] : memref<1x256x8xf32, #tpu.memory_space<vmem>>, vector<1x256x8xf32>
    %1 = vector.shape_cast %0 : vector<1x256x8xf32> to vector<256x8xf32>
    %c0_2 = arith.constant 0 : index
    %c0_3 = arith.constant 0 : index
    %2 = vector.load %arg2[%c0_2, %c0_3] : memref<1x8xf32, #tpu.memory_space<vmem>>, vector<1x8xf32>
    %3 = vector.broadcast %2 : vector<1x8xf32> to vector<256x8xf32>
    %4 = arith.mulf %1, %3 : vector<256x8xf32>
    %c0_4 = arith.constant 0 : index
    %c0_5 = arith.constant 0 : index
    %5 = vector.load %arg3[%c0_4, %c0_5] : memref<1x8xf32, #tpu.memory_space<vmem>>, vector<1x8xf32>
    %6 = vector.broadcast %5 : vector<1x8xf32> to vector<256x8xf32>
    %7 = arith.addf %4, %6 : vector<256x8xf32>
    %cst = arith.constant 0.000000e+00 : f32
    %8 = vector.broadcast %cst : f32 to vector<256x8xf32>
    %9 = arith.maximumf %7, %8 : vector<256x8xf32>
    %c0_6 = arith.constant 0 : index
    %c0_7 = arith.constant 0 : index
    %c0_8 = arith.constant 0 : index
    %10 = vector.load %arg4[%c0_6, %c0_7, %c0_8] : memref<1x256x8xf32, #tpu.memory_space<vmem>>, vector<1x256x8xf32>
    %11 = vector.shape_cast %10 : vector<1x256x8xf32> to vector<256x8xf32>
    %12 = vector.shape_cast %9 : vector<256x8xf32> to vector<1x256x8xf32>
    tpu.vector_store %arg4[%c0_6, %c0_7, %c0_8], %12 {strides = array<i32>} : memref<1x256x8xf32, #tpu.memory_space<vmem>>, vector<1x256x8xf32>,
    return
  }
  func.func @transform_0(%arg0: i32) -> (i32, i32, i32) {
    %c0_i32 = arith.constant 0 : i32
    %c0_i32_0 = arith.constant 0 : i32
    %c0_i32_1 = arith.constant 0 : i32
    return %arg0, %c0_i32, %c0_i32_0 : i32, i32, i32
  }
  func.func @transform_1(%arg0: i32) -> (i32, i32) {
    %c0_i32 = arith.constant 0 : i32
    %c0_i32_0 = arith.constant 0 : i32
    %c0_i32_1 = arith.constant 0 : i32
    return %c0_i32, %c0_i32_0 : i32, i32
  }
  func.func @transform_2(%arg0: i32) -> (i32, i32) {
    %c0_i32 = arith.constant 0 : i32
    %c0_i32_0 = arith.constant 0 : i32
    %c0_i32_1 = arith.constant 0 : i32
    return %c0_i32, %c0_i32_0 : i32, i32
  }
  func.func @transform_3(%arg0: i32) -> (i32, i32, i32) {
    %c0_i32 = arith.constant 0 : i32
    %c0_i32_0 = arith.constant 0 : i32
    %c0_i32_1 = arith.constant 0 : i32
    return %arg0, %c0_i32, %c0_i32_0 : i32, i32, i32
  }
}

</mosaic_0001>

<llo_original>
// kernel: vgg_block.3
$region0: #{vgg_block.3}
  #allocation0 [shape = 'u32[]', space=smem, size = 0x4, offset = 0x4, fixed_abs, tag = 'smem constant byte address 0x4 - core index']
  #allocation1 [shape = 'u32[144,128]{1,0:T(1,128)}', space=vmem, size = 0x12000, scoped, tag = 'internal scratch']
  %s0 = inlined_call_operand.vmem [shape: f32[2,256,8], index: 0, kind: input, shape index: {}, may-alias: {0,3}]
  %s1 = inlined_call_operand.vmem [shape: f32[1,8], index: 1, kind: input, shape index: {}]
  %s2 = inlined_call_operand.vmem [shape: f32[1,8], index: 2, kind: input, shape index: {}]
  %s3 = inlined_call_operand.vmem [shape: f32[2,256,8], index: 3, kind: output, shape index: {}, may-alias: {0,3}]
  %s4 = sld [smem:[#allocation0]]
  $region45: #{vgg_block.3} parent=0
    _
  %s6 = ssub.s32 1, %s4
  %s7 = scalar_select 0, %s6, %s4
  loop: start=0, step=1, limit=4
  $region2: #{vgg_block.3} parent=0 // loop_pre_header
    _
  $region3: #{vgg_block.3} parent=0 // loop_header
    %s9 = sphi 0, %s13
    %p10 = scmp.ge.s32.totalorder %s9, 4
    %s19 = sphi 0, %s21
    %s22 = sphi 0, %s19
    %s23 = sphi 0, %s22
    %s39 = sphi 0, %s23
    %s43 = sphi 0, %s43
    %s45 = sphi 0, %s43
    %s46 = sphi 0, %s45
    %s60 = sphi 0, %s46
    %s64 = sphi 0, %s64
    %s66 = sphi 0, %s64
    %s67 = sphi 0, %s66
    %s81 = sphi 0, %s67
    %s87 = sphi 0, %s89
    %s90 = sphi 0, %s87
    %s91 = sphi 0, %s90
    %s107 = sphi 0, %s91
  $region4: #{vgg_block.3} parent=0 // loop_header_branch
    %12 = sbr.rel (%p10) target = $region8
  $region5: #{vgg_block.3} parent=0 // loop_body
    %s14 = ssub.s32 %s9, 1
    %s15 = ssub.s32 %s9, 2
    %s16 = sadd.s32 %s9, 1
    %s17 = ssub.s32 %s9, %s16
    %p18 = scmp.eq.s32.totalorder %s17, 0
    %s20 = sadd.s32 %s19, 1
    %s21 = scalar_select %p18, %s19, %s20
    %p24 = pneg %p18
    %p25 = scmp.eq.s32.totalorder %s9, 1
    %p26 = por %p24, %p25
    %p27 = scmp.ne.s32.totalorder %s19, %s22
    %p28 = scmp.eq.s32.totalorder %s9, 0
    %p29 = por %p27, %p28
    %p30 = scmp.ne.s32.totalorder %s19, %s22
    %p31 = scmp.eq.s32.totalorder %s14, 1
    %p32 = por %p30, %p31
    %p33 = scmp.ne.s32.totalorder %s22, %s23
    %p34 = scmp.eq.s32.totalorder %s14, 0
    %p35 = por %p33, %p34
    %p36 = scmp.ne.s32.totalorder %s22, %s23
    %p37 = scmp.eq.s32.totalorder %s15, 1
    %p38 = por %p36, %p37
    %p40 = scmp.ne.s32.totalorder %s23, %s39
    %p41 = scmp.eq.s32.totalorder %s15, 0
    %p42 = por %p40, %p41
    %s44 = sadd.s32 %s43, 1
    %p47 = scmp.eq.s32.totalorder %s9, 1
    %p48 = scmp.ne.s32.totalorder %s43, %s45
    %p49 = scmp.eq.s32.totalorder %s9, 0
    %p50 = por %p48, %p49
    %p51 = scmp.ne.s32.totalorder %s43, %s45
    %p52 = scmp.eq.s32.totalorder %s14, 1
    %p53 = por %p51, %p52
    %p54 = scmp.ne.s32.totalorder %s45, %s46
    %p55 = scmp.eq.s32.totalorder %s14, 0
    %p56 = por %p54, %p55
    %p57 = scmp.ne.s32.totalorder %s45, %s46
    %p58 = scmp.eq.s32.totalorder %s15, 1
    %p59 = por %p57, %p58
    %p61 = scmp.ne.s32.totalorder %s46, %s60
    %p62 = scmp.eq.s32.totalorder %s15, 0
    %p63 = por %p61, %p62
    %s65 = sadd.s32 %s64, 1
    %p68 = scmp.eq.s32.totalorder %s9, 1
    %p69 = scmp.ne.s32.totalorder %s64, %s66
    %p70 = scmp.eq.s32.totalorder %s9, 0
    %p71 = por %p69, %p70
    %p72 = scmp.ne.s32.totalorder %s64, %s66
    %p73 = scmp.eq.s32.totalorder %s14, 1
    %p74 = por %p72, %p73
    %p75 = scmp.ne.s32.totalorder %s66, %s67
    %p76 = scmp.eq.s32.totalorder %s14, 0
    %p77 = por %p75, %p76
    %p78 = scmp.ne.s32.totalorder %s66, %s67
    %p79 = scmp.eq.s32.totalorder %s15, 1
    %p80 = por %p78, %p79
    %p82 = scmp.ne.s32.totalorder %s67, %s81
    %p83 = scmp.eq.s32.totalorder %s15, 0
    %p84 = por %p82, %p83
    %s85 = ssub.s32 %s9, %s16
    %p86 = scmp.eq.s32.totalorder %s85, 0
    %s88 = sadd.s32 %s87, 1
    %s89 = scalar_select %p86, %s87, %s88
    %p92 = pneg %p86
    %p93 = scmp.eq.s32.totalorder %s9, 1
    %p94 = por %p92, %p93
    %p95 = scmp.ne.s32.totalorder %s87, %s90
    %p96 = scmp.eq.s32.totalorder %s9, 0
    %p97 = por %p95, %p96
    %p98 = scmp.ne.s32.totalorder %s87, %s90
    %p99 = scmp.eq.s32.totalorder %s14, 1
    %p100 = por %p98, %p99
    %p101 = scmp.ne.s32.totalorder %s90, %s91
    %p102 = scmp.eq.s32.totalorder %s14, 0
    %p103 = por %p101, %p102
    %p104 = scmp.ne.s32.totalorder %s90, %s91
    %p105 = scmp.eq.s32.totalorder %s15, 1
    %p106 = por %p104, %p105
    %p108 = scmp.ne.s32.totalorder %s91, %s107
    %p109 = scmp.eq.s32.totalorder %s15, 0
    %p110 = por %p108, %p109
    %p111 = scmp.le.s32.totalorder 1, %s9
    %p112 = scmp.lt.s32.totalorder %s9, 3
    %p113 = pnand %p111, %p112
    %p114 = pneg %p113
    // Predicated region
    $region9: #{vgg_block.3} parent=5 // pred_check
      _
    $region10: #{vgg_block.3} parent=5 // pred_check_branch
      %116 = sbr.rel (%p113) target = $region12
    $region11: #{vgg_block.3} parent=5 // pred_region
      %s117 = ssub.s32 %s9, 1
      // Predicated region
      $region13: #{vgg_block.3} parent=11 // pred_check
        %p118 = pneg %p56
      $region14: #{vgg_block.3} parent=11 // pred_check_branch
        %120 = sbr.rel (%p118) target = $region16
      $region15: #{vgg_block.3} parent=11 // pred_region
        _
      $region16: #{vgg_block.3} parent=11 // pred_fallthru
        _
      // Predicated region
      $region17: #{vgg_block.3} parent=11 // pred_check
        %p121 = pneg %p77
      $region18: #{vgg_block.3} parent=11 // pred_check_branch
        %123 = sbr.rel (%p121) target = $region20
      $region19: #{vgg_block.3} parent=11 // pred_region
        _
      $region20: #{vgg_block.3} parent=11 // pred_fallthru
        _
    $region12: #{vgg_block.3} parent=5 // pred_fallthru
      _
    %p124 = scmp.lt.s32.totalorder %s9, 2
    // Predicated region
    $region21: #{vgg_block.3} parent=5 // pred_check
      %p125 = pneg %p124
    $region22: #{vgg_block.3} parent=5 // pred_check_branch
      %127 = sbr.rel (%p125) target = $region24
    $region23: #{vgg_block.3} parent=5 // pred_region
      // Predicated region
      $region25: #{vgg_block.3} parent=23 // pred_check
        %p128 = pneg %p29
      $region26: #{vgg_block.3} parent=23 // pred_check_branch
        %130 = sbr.rel (%p128) target = $region28
      $region27: #{vgg_block.3} parent=23 // pred_region
        %p131 = scmp.lt.s32.totalorder %s9, 1
        %s132 = scalar_select %p131, %s9, 1
        %s133 = smul.addr %s132, 32
        %s134 = smul.addr %s133, 8
        %s135 = scalar_lea.vmem %s0, %s134
      $region28: #{vgg_block.3} parent=23 // pred_fallthru
        _
    $region24: #{vgg_block.3} parent=5 // pred_fallthru
      _
    %p136 = scmp.le.s32.totalorder 1, %s9
    %p137 = scmp.lt.s32.totalorder %s9, 3
    %p138 = pnand %p136, %p137
    %p139 = pneg %p138
    // Predicated region
    $region29: #{vgg_block.3} parent=5 // pred_check
      _
    $region30: #{vgg_block.3} parent=5 // pred_check_branch
      %141 = sbr.rel (%p138) target = $region32
    $region31: #{vgg_block.3} parent=5 // pred_region
      %s142 = ssub.s32 %s9, 1
      %p143 = scmp.lt.s32.totalorder %s14, 1
      %s144 = scalar_select %p143, %s14, 1
      %s145 = smul.addr %s144, 32
      %s146 = smul.addr %s145, 8
      %s147 = scalar_lea.vmem %s0, %s146
      %p148 = pneg %p35
      %p149 = pneg %p32
      %p150 = pneg %p56
      %p151 = pneg %p53
      %p152 = pneg %p77
      %p153 = pneg %p74
      %p154 = pneg %p103
      %p155 = pneg %p100
      %p156 = scmp.lt.s32.totalorder %s14, 1
      %s157 = scalar_select %p156, %s14, 1
      %s158 = smul.addr %s157, 32
      %s159 = smul.addr %s158, 8
      %s160 = scalar_lea.vmem %s3, %s159
      %p161 = scmp.lt.s32.totalorder %s14, 1
      %s162 = scalar_select %p161, %s14, 1
      %s163 = smul.addr %s162, 32
      %s164 = smul.addr %s163, 8
      %s165 = scalar_lea.vmem %s0, %s164
      %p166 = scmp.lt.s32.totalorder %s14, 1
      %s167 = scalar_select %p166, %s14, 1
      %s168 = smul.addr %s167, 32
      %s169 = smul.addr %s168, 8
      %s170 = scalar_lea.vmem %s3, %s169
      %v171 = vld [vmem:[%s165] sm:$0xff]
      %v172 = vld [vmem:[%s165 + $0x8] sm:$0xff]
      %v173 = vld [vmem:[%s165 + $0x10] sm:$0xff]
      %v174 = vld [vmem:[%s165 + $0x18] sm:$0xff]
      %v175 = vld [vmem:[%s165 + $0x20] sm:$0xff]
      %v176 = vld [vmem:[%s165 + $0x28] sm:$0xff]
      %v177 = vld [vmem:[%s165 + $0x30] sm:$0xff]
      %v178 = vld [vmem:[%s165 + $0x38] sm:$0xff]
      %v179 = vld [vmem:[%s165 + $0x40] sm:$0xff]
      %v180 = vld [vmem:[%s165 + $0x48] sm:$0xff]
      %v181 = vld [vmem:[%s165 + $0x50] sm:$0xff]
      %v182 = vld [vmem:[%s165 + $0x58] sm:$0xff]
      %v183 = vld [vmem:[%s165 + $0x60] sm:$0xff]
      %v184 = vld [vmem:[%s165 + $0x68] sm:$0xff]
      %v185 = vld [vmem:[%s165 + $0x70] sm:$0xff]
      %v186 = vld [vmem:[%s165 + $0x78] sm:$0xff]
      %v187 = vld [vmem:[%s165 + $0x80] sm:$0xff]
      %v188 = vld [vmem:[%s165 + $0x88] sm:$0xff]
      %v189 = vld [vmem:[%s165 + $0x90] sm:$0xff]
      %v190 = vld [vmem:[%s165 + $0x98] sm:$0xff]
      %v191 = vld [vmem:[%s165 + $0xa0] sm:$0xff]
      %v192 = vld [vmem:[%s165 + $0xa8] sm:$0xff]
      %v193 = vld [vmem:[%s165 + $0xb0] sm:$0xff]
      %v194 = vld [vmem:[%s165 + $0xb8] sm:$0xff]
      %v195 = vld [vmem:[%s165 + $0xc0] sm:$0xff]
      %v196 = vld [vmem:[%s165 + $0xc8] sm:$0xff]
      %v197 = vld [vmem:[%s165 + $0xd0] sm:$0xff]
      %v198 = vld [vmem:[%s165 + $0xd8] sm:$0xff]
      %v199 = vld [vmem:[%s165 + $0xe0] sm:$0xff]
      %v200 = vld [vmem:[%s165 + $0xe8] sm:$0xff]
      %v201 = vld [vmem:[%s165 + $0xf0] sm:$0xff]
      %v202 = vld [vmem:[%s165 + $0xf8] sm:$0xff]
      %v203 = vld [vmem:[%s1] sm:$0x1]
      %v205 = vlaneseq
      %v206 = vshrl.u32 %v205, 7
      %v207 = vsub.s32 0, %v206
      %v208 = vrot.slane %v203, %v207
      %v210 = vmul.f32 %v171, %v208
      %v211 = vmul.f32 %v172, %v208
      %v212 = vmul.f32 %v173, %v208
      %v213 = vmul.f32 %v174, %v208
      %v214 = vmul.f32 %v175, %v208
      %v215 = vmul.f32 %v176, %v208
      %v216 = vmul.f32 %v177, %v208
      %v217 = vmul.f32 %v178, %v208
      %v218 = vmul.f32 %v179, %v208
      %v219 = vmul.f32 %v180, %v208
      %v220 = vmul.f32 %v181, %v208
      %v221 = vmul.f32 %v182, %v208
      %v222 = vmul.f32 %v183, %v208
      %v223 = vmul.f32 %v184, %v208
      %v224 = vmul.f32 %v185, %v208
      %v225 = vmul.f32 %v186, %v208
      %v226 = vmul.f32 %v187, %v208
      %v227 = vmul.f32 %v188, %v208
      %v228 = vmul.f32 %v189, %v208
      %v229 = vmul.f32 %v190, %v208
      %v230 = vmul.f32 %v191, %v208
      %v231 = vmul.f32 %v192, %v208
      %v232 = vmul.f32 %v193, %v208
      %v233 = vmul.f32 %v194, %v208
      %v234 = vmul.f32 %v195, %v208
      %v235 = vmul.f32 %v196, %v208
      %v236 = vmul.f32 %v197, %v208
      %v237 = vmul.f32 %v198, %v208
      %v238 = vmul.f32 %v199, %v208
      %v239 = vmul.f32 %v200, %v208
      %v240 = vmul.f32 %v201, %v208
      %v241 = vmul.f32 %v202, %v208
      %v242 = vld [vmem:[%s2] sm:$0x1]
      %v244 = vlaneseq
      %v245 = vshrl.u32 %v244, 7
      %v246 = vsub.s32 0, %v245
      %v247 = vrot.slane %v242, %v246
      %v249 = vadd.f32 %v210, %v247
      %v250 = vadd.f32 %v211, %v247
      %v251 = vadd.f32 %v212, %v247
      %v252 = vadd.f32 %v213, %v247
      %v253 = vadd.f32 %v214, %v247
      %v254 = vadd.f32 %v215, %v247
      %v255 = vadd.f32 %v216, %v247
      %v256 = vadd.f32 %v217, %v247
      %v257 = vadd.f32 %v218, %v247
      %v258 = vadd.f32 %v219, %v247
      %v259 = vadd.f32 %v220, %v247
      %v260 = vadd.f32 %v221, %v247
      %v261 = vadd.f32 %v222, %v247
      %v262 = vadd.f32 %v223, %v247
      %v263 = vadd.f32 %v224, %v247
      %v264 = vadd.f32 %v225, %v247
      %v265 = vadd.f32 %v226, %v247
      %v266 = vadd.f32 %v227, %v247
      %v267 = vadd.f32 %v228, %v247
      %v268 = vadd.f32 %v229, %v247
      %v269 = vadd.f32 %v230, %v247
      %v270 = vadd.f32 %v231, %v247
      %v271 = vadd.f32 %v232, %v247
      %v272 = vadd.f32 %v233, %v247
      %v273 = vadd.f32 %v234, %v247
      %v274 = vadd.f32 %v235, %v247
      %v275 = vadd.f32 %v236, %v247
      %v276 = vadd.f32 %v237, %v247
      %v277 = vadd.f32 %v238, %v247
      %v278 = vadd.f32 %v239, %v247
      %v279 = vadd.f32 %v240, %v247
      %v280 = vadd.f32 %v241, %v247
      %v281 = vmax.f32 %v249, 0.0
      %v282 = vmax.f32 %v250, 0.0
      %v283 = vmax.f32 %v251, 0.0
      %v284 = vmax.f32 %v252, 0.0
      %v285 = vmax.f32 %v253, 0.0
      %v286 = vmax.f32 %v254, 0.0
      %v287 = vmax.f32 %v255, 0.0
      %v288 = vmax.f32 %v256, 0.0
      %v289 = vmax.f32 %v257, 0.0
      %v290 = vmax.f32 %v258, 0.0
      %v291 = vmax.f32 %v259, 0.0
      %v292 = vmax.f32 %v260, 0.0
      %v293 = vmax.f32 %v261, 0.0
      %v294 = vmax.f32 %v262, 0.0
      %v295 = vmax.f32 %v263, 0.0
      %v296 = vmax.f32 %v264, 0.0
      %v297 = vmax.f32 %v265, 0.0
      %v298 = vmax.f32 %v266, 0.0
      %v299 = vmax.f32 %v267, 0.0
      %v300 = vmax.f32 %v268, 0.0
      %v301 = vmax.f32 %v269, 0.0
      %v302 = vmax.f32 %v270, 0.0
      %v303 = vmax.f32 %v271, 0.0
      %v304 = vmax.f32 %v272, 0.0
      %v305 = vmax.f32 %v273, 0.0
      %v306 = vmax.f32 %v274, 0.0
      %v307 = vmax.f32 %v275, 0.0
      %v308 = vmax.f32 %v276, 0.0
      %v309 = vmax.f32 %v277, 0.0
      %v310 = vmax.f32 %v278, 0.0
      %v311 = vmax.f32 %v279, 0.0
      %v312 = vmax.f32 %v280, 0.0
      %vm313 = vcmask 64512
      %314 = vst.msk [vmem:[%s170] sm:$0xff] %vm313, %v281
      %315 = vst.msk [vmem:[%s170 + $0x8] sm:$0xff] %vm313, %v282
      %316 = vst.msk [vmem:[%s170 + $0x10] sm:$0xff] %vm313, %v283
      %317 = vst.msk [vmem:[%s170 + $0x18] sm:$0xff] %vm313, %v284
      %318 = vst.msk [vmem:[%s170 + $0x20] sm:$0xff] %vm313, %v285
      %319 = vst.msk [vmem:[%s170 + $0x28] sm:$0xff] %vm313, %v286
      %320 = vst.msk [vmem:[%s170 + $0x30] sm:$0xff] %vm313, %v287
      %321 = vst.msk [vmem:[%s170 + $0x38] sm:$0xff] %vm313, %v288
      %322 = vst.msk [vmem:[%s170 + $0x40] sm:$0xff] %vm313, %v289
      %323 = vst.msk [vmem:[%s170 + $0x48] sm:$0xff] %vm313, %v290
      %324 = vst.msk [vmem:[%s170 + $0x50] sm:$0xff] %vm313, %v291
      %325 = vst.msk [vmem:[%s170 + $0x58] sm:$0xff] %vm313, %v292
      %326 = vst.msk [vmem:[%s170 + $0x60] sm:$0xff] %vm313, %v293
      %327 = vst.msk [vmem:[%s170 + $0x68] sm:$0xff] %vm313, %v294
      %328 = vst.msk [vmem:[%s170 + $0x70] sm:$0xff] %vm313, %v295
      %329 = vst.msk [vmem:[%s170 + $0x78] sm:$0xff] %vm313, %v296
      %330 = vst.msk [vmem:[%s170 + $0x80] sm:$0xff] %vm313, %v297
      %331 = vst.msk [vmem:[%s170 + $0x88] sm:$0xff] %vm313, %v298
      %332 = vst.msk [vmem:[%s170 + $0x90] sm:$0xff] %vm313, %v299
      %333 = vst.msk [vmem:[%s170 + $0x98] sm:$0xff] %vm313, %v300
      %334 = vst.msk [vmem:[%s170 + $0xa0] sm:$0xff] %vm313, %v301
      %335 = vst.msk [vmem:[%s170 + $0xa8] sm:$0xff] %vm313, %v302
      %336 = vst.msk [vmem:[%s170 + $0xb0] sm:$0xff] %vm313, %v303
      %337 = vst.msk [vmem:[%s170 + $0xb8] sm:$0xff] %vm313, %v304
      %338 = vst.msk [vmem:[%s170 + $0xc0] sm:$0xff] %vm313, %v305
      %339 = vst.msk [vmem:[%s170 + $0xc8] sm:$0xff] %vm313, %v306
      %340 = vst.msk [vmem:[%s170 + $0xd0] sm:$0xff] %vm313, %v307
      %341 = vst.msk [vmem:[%s170 + $0xd8] sm:$0xff] %vm313, %v308
      %342 = vst.msk [vmem:[%s170 + $0xe0] sm:$0xff] %vm313, %v309
      %343 = vst.msk [vmem:[%s170 + $0xe8] sm:$0xff] %vm313, %v310
      %344 = vst.msk [vmem:[%s170 + $0xf0] sm:$0xff] %vm313, %v311
      %345 = vst.msk [vmem:[%s170 + $0xf8] sm:$0xff] %vm313, %v312
      %p346 = scmp.lt.s32.totalorder %s14, 1
      %s347 = scalar_select %p346, %s14, 1
      %s348 = smul.addr %s347, 32
      %s349 = smul.addr %s348, 8
      %s350 = scalar_lea.vmem %s3, %s349
      // Predicated region
      $region33: #{vgg_block.3} parent=31 // pred_check
        %p351 = pneg %p100
      $region34: #{vgg_block.3} parent=31 // pred_check_branch
        %353 = sbr.rel (%p351) target = $region36
      $region35: #{vgg_block.3} parent=31 // pred_region
        _
      $region36: #{vgg_block.3} parent=31 // pred_fallthru
        _
    $region32: #{vgg_block.3} parent=5 // pred_fallthru
      _
    %p354 = scmp.le.s32.totalorder 2, %s9
    // Predicated region
    $region37: #{vgg_block.3} parent=5 // pred_check
      %p355 = pneg %p354
    $region38: #{vgg_block.3} parent=5 // pred_check_branch
      %357 = sbr.rel (%p355) target = $region40
    $region39: #{vgg_block.3} parent=5 // pred_region
      %s358 = ssub.s32 %s9, 2
      // Predicated region
      $region41: #{vgg_block.3} parent=39 // pred_check
        %p359 = pneg %p106
      $region42: #{vgg_block.3} parent=39 // pred_check_branch
        %361 = sbr.rel (%p359) target = $region44
      $region43: #{vgg_block.3} parent=39 // pred_region
        %p362 = scmp.lt.s32.totalorder %s15, 1
        %s363 = scalar_select %p362, %s15, 1
        %s364 = smul.addr %s363, 32
        %s365 = smul.addr %s364, 8
        %s366 = scalar_lea.vmem %s3, %s365
      $region44: #{vgg_block.3} parent=39 // pred_fallthru
        _
    $region40: #{vgg_block.3} parent=5 // pred_fallthru
      _
  $region6: #{vgg_block.3} parent=0 // loop_footer
    %s13 = sadd.s32 1, %s9
  $region7: #{vgg_block.3} parent=0 // loop_footer_branch
    %8 = sbr.rel target = $region3
  $region8: #{vgg_block.3} parent=0 // loop_exit
    _

// kernel: vgg_block.2
$region0: #{vgg_block.2}
  #allocation0 [shape = 'u32[]', space=smem, size = 0x4, offset = 0x4, fixed_abs, tag = 'smem constant byte address 0x4 - core index']
  #allocation1 [shape = 'u32[144,128]{1,0:T(1,128)}', space=vmem, size = 0x12000, scoped, tag = 'internal scratch']
  #allocation2 [shape = 'bf16[16,16,36]{2,1,0:T(16,128)(2,1)}', space=vmem, size = 0x10000, scoped, tag = 'scratch operand']
  %s0 = inlined_call_operand.vmem [shape: bf16[2,18,18,4], index: 0, kind: input, shape index: {}]
  %s1 = inlined_call_operand.vmem [shape: bf16[36,8], index: 1, kind: input, shape index: {}]
  %s2 = inlined_call_operand.vmem [shape: f32[2,256,8], index: 2, kind: output, shape index: {0}]
  %s3 = inlined_call_operand.vmem [shape: f32[2,2,8], index: 3, kind: output, shape index: {1}]
  %4 = xla_tuple %s2, %s3
  %s5 = sld [smem:[#allocation0]]
  $region49: #{vgg_block.2} parent=0
    _
  %s7 = ssub.s32 1, %s5
  %s8 = scalar_select 0, %s7, %s5
  loop: start=0, step=1, limit=4
  $region2: #{vgg_block.2} parent=0 // loop_pre_header
    _
  $region3: #{vgg_block.2} parent=0 // loop_header
    %s10 = sphi 0, %s14
    %p11 = scmp.ge.s32.totalorder %s10, 4
    %s20 = sphi 0, %s22
    %s23 = sphi 0, %s20
    %s24 = sphi 0, %s23
    %s40 = sphi 0, %s24
    %s44 = sphi 0, %s44
    %s46 = sphi 0, %s44
    %s47 = sphi 0, %s46
    %s61 = sphi 0, %s47
    %s67 = sphi 0, %s69
    %s70 = sphi 0, %s67
    %s71 = sphi 0, %s70
    %s87 = sphi 0, %s71
    %s93 = sphi 0, %s95
    %s96 = sphi 0, %s93
    %s97 = sphi 0, %s96
    %s113 = sphi 0, %s97
  $region4: #{vgg_block.2} parent=0 // loop_header_branch
    %13 = sbr.rel (%p11) target = $region8
  $region5: #{vgg_block.2} parent=0 // loop_body
    %s15 = ssub.s32 %s10, 1
    %s16 = ssub.s32 %s10, 2
    %s17 = sadd.s32 %s10, 1
    %s18 = ssub.s32 %s10, %s17
    %p19 = scmp.eq.s32.totalorder %s18, 0
    %s21 = sadd.s32 %s20, 1
    %s22 = scalar_select %p19, %s20, %s21
    %p25 = pneg %p19
    %p26 = scmp.eq.s32.totalorder %s10, 1
    %p27 = por %p25, %p26
    %p28 = scmp.ne.s32.totalorder %s20, %s23
    %p29 = scmp.eq.s32.totalorder %s10, 0
    %p30 = por %p28, %p29
    %p31 = scmp.ne.s32.totalorder %s20, %s23
    %p32 = scmp.eq.s32.totalorder %s15, 1
    %p33 = por %p31, %p32
    %p34 = scmp.ne.s32.totalorder %s23, %s24
    %p35 = scmp.eq.s32.totalorder %s15, 0
    %p36 = por %p34, %p35
    %p37 = scmp.ne.s32.totalorder %s23, %s24
    %p38 = scmp.eq.s32.totalorder %s16, 1
    %p39 = por %p37, %p38
    %p41 = scmp.ne.s32.totalorder %s24, %s40
    %p42 = scmp.eq.s32.totalorder %s16, 0
    %p43 = por %p41, %p42
    %s45 = sadd.s32 %s44, 1
    %p48 = scmp.eq.s32.totalorder %s10, 1
    %p49 = scmp.ne.s32.totalorder %s44, %s46
    %p50 = scmp.eq.s32.totalorder %s10, 0
    %p51 = por %p49, %p50
    %p52 = scmp.ne.s32.totalorder %s44, %s46
    %p53 = scmp.eq.s32.totalorder %s15, 1
    %p54 = por %p52, %p53
    %p55 = scmp.ne.s32.totalorder %s46, %s47
    %p56 = scmp.eq.s32.totalorder %s15, 0
    %p57 = por %p55, %p56
    %p58 = scmp.ne.s32.totalorder %s46, %s47
    %p59 = scmp.eq.s32.totalorder %s16, 1
    %p60 = por %p58, %p59
    %p62 = scmp.ne.s32.totalorder %s47, %s61
    %p63 = scmp.eq.s32.totalorder %s16, 0
    %p64 = por %p62, %p63
    %s65 = ssub.s32 %s10, %s17
    %p66 = scmp.eq.s32.totalorder %s65, 0
    %s68 = sadd.s32 %s67, 1
    %s69 = scalar_select %p66, %s67, %s68
    %p72 = pneg %p66
    %p73 = scmp.eq.s32.totalorder %s10, 1
    %p74 = por %p72, %p73
    %p75 = scmp.ne.s32.totalorder %s67, %s70
    %p76 = scmp.eq.s32.totalorder %s10, 0
    %p77 = por %p75, %p76
    %p78 = scmp.ne.s32.totalorder %s67, %s70
    %p79 = scmp.eq.s32.totalorder %s15, 1
    %p80 = por %p78, %p79
    %p81 = scmp.ne.s32.totalorder %s70, %s71
    %p82 = scmp.eq.s32.totalorder %s15, 0
    %p83 = por %p81, %p82
    %p84 = scmp.ne.s32.totalorder %s70, %s71
    %p85 = scmp.eq.s32.totalorder %s16, 1
    %p86 = por %p84, %p85
    %p88 = scmp.ne.s32.totalorder %s71, %s87
    %p89 = scmp.eq.s32.totalorder %s16, 0
    %p90 = por %p88, %p89
    %s91 = ssub.s32 %s10, %s17
    %p92 = scmp.eq.s32.totalorder %s91, 0
    %s94 = sadd.s32 %s93, 1
    %s95 = scalar_select %p92, %s93, %s94
    %p98 = pneg %p92
    %p99 = scmp.eq.s32.totalorder %s10, 1
    %p100 = por %p98, %p99
    %p101 = scmp.ne.s32.totalorder %s93, %s96
    %p102 = scmp.eq.s32.totalorder %s10, 0
    %p103 = por %p101, %p102
    %p104 = scmp.ne.s32.totalorder %s93, %s96
    %p105 = scmp.eq.s32.totalorder %s15, 1
    %p106 = por %p104, %p105
    %p107 = scmp.ne.s32.totalorder %s96, %s97
    %p108 = scmp.eq.s32.totalorder %s15, 0
    %p109 = por %p107, %p108
    %p110 = scmp.ne.s32.totalorder %s96, %s97
    %p111 = scmp.eq.s32.totalorder %s16, 1
    %p112 = por %p110, %p111
    %p114 = scmp.ne.s32.totalorder %s97, %s113
    %p115 = scmp.eq.s32.totalorder %s16, 0
    %p116 = por %p114, %p115
    %p117 = scmp.le.s32.totalorder 1, %s10
    %p118 = scmp.lt.s32.totalorder %s10, 3
    %p119 = pnand %p117, %p118
    %p120 = pneg %p119
    // Predicated region
    $region9: #{vgg_block.2} parent=5 // pred_check
      _
    $region10: #{vgg_block.2} parent=5 // pred_check_branch
      %122 = sbr.rel (%p119) target = $region12
    $region11: #{vgg_block.2} parent=5 // pred_region
      %s123 = ssub.s32 %s10, 1
      // Predicated region
      $region13: #{vgg_block.2} parent=11 // pred_check
        %p124 = pneg %p57
      $region14: #{vgg_block.2} parent=11 // pred_check_branch
        %126 = sbr.rel (%p124) target = $region16
      $region15: #{vgg_block.2} parent=11 // pred_region
        _
      $region16: #{vgg_block.2} parent=11 // pred_fallthru
        _
    $region12: #{vgg_block.2} parent=5 // pred_fallthru
      _
    %p127 = scmp.lt.s32.totalorder %s10, 2
    // Predicated region
    $region17: #{vgg_block.2} parent=5 // pred_check
      %p128 = pneg %p127
    $region18: #{vgg_block.2} parent=5 // pred_check_branch
      %130 = sbr.rel (%p128) target = $region20
    $region19: #{vgg_block.2} parent=5 // pred_region
      // Predicated region
      $region21: #{vgg_block.2} parent=19 // pred_check
        %p131 = pneg %p30
      $region22: #{vgg_block.2} parent=19 // pred_check_branch
        %133 = sbr.rel (%p131) target = $region24
      $region23: #{vgg_block.2} parent=19 // pred_region
        %p134 = scmp.lt.s32.totalorder %s10, 1
        %s135 = scalar_select %p134, %s10, 1
        %s136 = smul.addr %s135, 54
        %s137 = smul.addr %s136, 4
        %s138 = scalar_lea.vmem %s0, %s137
      $region24: #{vgg_block.2} parent=19 // pred_fallthru
        _
    $region20: #{vgg_block.2} parent=5 // pred_fallthru
      _
    %p139 = scmp.le.s32.totalorder 1, %s10
    %p140 = scmp.lt.s32.totalorder %s10, 3
    %p141 = pnand %p139, %p140
    %p142 = pneg %p141
    // Predicated region
    $region25: #{vgg_block.2} parent=5 // pred_check
      _
    $region26: #{vgg_block.2} parent=5 // pred_check_branch
      %144 = sbr.rel (%p141) target = $region28
    $region27: #{vgg_block.2} parent=5 // pred_region
      %s145 = ssub.s32 %s10, 1
      %p146 = scmp.lt.s32.totalorder %s15, 1
      %s147 = scalar_select %p146, %s15, 1
      %s148 = smul.addr %s147, 54
      %s149 = smul.addr %s148, 4
      %s150 = scalar_lea.vmem %s0, %s149
      %p151 = pneg %p36
      %p152 = pneg %p33
      %p153 = pneg %p57
      %p154 = pneg %p54
      %p155 = pneg %p83
      %p156 = pneg %p80
      %p157 = scmp.lt.s32.totalorder %s15, 1
      %s158 = scalar_select %p157, %s15, 1
      %s159 = smul.addr %s158, 32
      %s160 = smul.addr %s159, 8
      %s161 = scalar_lea.vmem %s2, %s160
      %p162 = pneg %p109
      %p163 = pneg %p106
      %p164 = scmp.lt.s32.totalorder %s15, 1
      %s165 = scalar_select %p164, %s15, 1
      %s166 = smul.addr %s165, 2
      %s167 = scalar_lea.vmem %s3, %s166
      %p168 = scmp.lt.s32.totalorder %s15, 1
      %s169 = scalar_select %p168, %s15, 1
      %s170 = smul.addr %s169, 54
      %s171 = smul.addr %s170, 4
      %s172 = scalar_lea.vmem %s0, %s171
      %p173 = scmp.lt.s32.totalorder %s15, 1
      %s174 = scalar_select %p173, %s15, 1
      %s175 = smul.addr %s174, 32
      %s176 = smul.addr %s175, 8
      %s177 = scalar_lea.vmem %s2, %s176
      %p178 = scmp.lt.s32.totalorder %s15, 1
      %s179 = scalar_select %p178, %s15, 1
      %s180 = smul.addr %s179, 2
      %s181 = scalar_lea.vmem %s3, %s180
      %v183 = vld [vmem:[%s172] sm:$0xf]
      %v184 = vld [vmem:[%s172 + $0x4] sm:$0xf]
      %v185 = vld [vmem:[%s172 + $0x8] sm:$0x1]
      %v186 = vld [vmem:[%s172 + $0xc] sm:$0xf]
      %v187 = vld [vmem:[%s172 + $0x10] sm:$0xf]
      %v188 = vld [vmem:[%s172 + $0x14] sm:$0x1]
      %v189 = vld [vmem:[%s172 + $0x18] sm:$0xf]
      %v190 = vld [vmem:[%s172 + $0x1c] sm:$0xf]
      %v191 = vld [vmem:[%s172 + $0x20] sm:$0x1]
      %v192 = vld [vmem:[%s172 + $0x24] sm:$0xf]
      %v193 = vld [vmem:[%s172 + $0x28] sm:$0xf]
      %v194 = vld [vmem:[%s172 + $0x2c] sm:$0x1]
      %v195 = vld [vmem:[%s172 + $0x30] sm:$0xf]
      %v196 = vld [vmem:[%s172 + $0x34] sm:$0xf]
      %v197 = vld [vmem:[%s172 + $0x38] sm:$0x1]
      %v198 = vld [vmem:[%s172 + $0x3c] sm:$0xf]
      %v199 = vld [vmem:[%s172 + $0x40] sm:$0xf]
      %v200 = vld [vmem:[%s172 + $0x44] sm:$0x1]
      %v201 = vld [vmem:[%s172 + $0x48] sm:$0xf]
      %v202 = vld [vmem:[%s172 + $0x4c] sm:$0xf]
      %v203 = vld [vmem:[%s172 + $0x50] sm:$0x1]
      %v204 = vld [vmem:[%s172 + $0x54] sm:$0xf]
      %v205 = vld [vmem:[%s172 + $0x58] sm:$0xf]
      %v206 = vld [vmem:[%s172 + $0x5c] sm:$0x1]
      %v207 = vld [vmem:[%s172 + $0x60] sm:$0xf]
      %v208 = vld [vmem:[%s172 + $0x64] sm:$0xf]
      %v209 = vld [vmem:[%s172 + $0x68] sm:$0x1]
      %v210 = vld [vmem:[%s172 + $0x6c] sm:$0xf]
      %v211 = vld [vmem:[%s172 + $0x70] sm:$0xf]
      %v212 = vld [vmem:[%s172 + $0x74] sm:$0x1]
      %v213 = vld [vmem:[%s172 + $0x78] sm:$0xf]
      %v214 = vld [vmem:[%s172 + $0x7c] sm:$0xf]
      %v215 = vld [vmem:[%s172 + $0x80] sm:$0x1]
      %v216 = vld [vmem:[%s172 + $0x84] sm:$0xf]
      %v217 = vld [vmem:[%s172 + $0x88] sm:$0xf]
      %v218 = vld [vmem:[%s172 + $0x8c] sm:$0x1]
      %v219 = vld [vmem:[%s172 + $0x90] sm:$0xf]
      %v220 = vld [vmem:[%s172 + $0x94] sm:$0xf]
      %v221 = vld [vmem:[%s172 + $0x98] sm:$0x1]
      %v222 = vld [vmem:[%s172 + $0x9c] sm:$0xf]
      %v223 = vld [vmem:[%s172 + $0xa0] sm:$0xf]
      %v224 = vld [vmem:[%s172 + $0xa4] sm:$0x1]
      %v225 = vld [vmem:[%s172 + $0xa8] sm:$0xf]
      %v226 = vld [vmem:[%s172 + $0xac] sm:$0xf]
      %v227 = vld [vmem:[%s172 + $0xb0] sm:$0x1]
      %v228 = vld [vmem:[%s172 + $0xb4] sm:$0xf]
      %v229 = vld [vmem:[%s172 + $0xb8] sm:$0xf]
      %v230 = vld [vmem:[%s172 + $0xbc] sm:$0x1]
      %v231 = vld [vmem:[%s172 + $0xc0] sm:$0xf]
      %v232 = vld [vmem:[%s172 + $0xc4] sm:$0xf]
      %v233 = vld [vmem:[%s172 + $0xc8] sm:$0x1]
      %v234 = vld [vmem:[%s172 + $0xcc] sm:$0xf]
      %v235 = vld [vmem:[%s172 + $0xd0] sm:$0xf]
      %v236 = vld [vmem:[%s172 + $0xd4] sm:$0x1]
      %v269 = vunpack.c.l.b16 %v183
      %v270 = vunpack.c.l.b16 %v184
      %v271 = vunpack.c.l.b16 %v186
      %v272 = vunpack.c.l.b16 %v187
      %v273 = vunpack.c.l.b16 %v189
      %v274 = vunpack.c.l.b16 %v190
      %v275 = vunpack.c.l.b16 %v192
      %v276 = vunpack.c.l.b16 %v193
      %v277 = vunpack.c.l.b16 %v195
      %v278 = vunpack.c.l.b16 %v196
      %v279 = vunpack.c.l.b16 %v198
      %v280 = vunpack.c.l.b16 %v199
      %v281 = vunpack.c.l.b16 %v201
      %v282 = vunpack.c.l.b16 %v202
      %v283 = vunpack.c.l.b16 %v204
      %v284 = vunpack.c.l.b16 %v205
      %v285 = vunpack.c.l.b16 %v207
      %v286 = vunpack.c.l.b16 %v208
      %v287 = vunpack.c.l.b16 %v210
      %v288 = vunpack.c.l.b16 %v211
      %v289 = vunpack.c.l.b16 %v213
      %v290 = vunpack.c.l.b16 %v214
      %v291 = vunpack.c.l.b16 %v216
      %v292 = vunpack.c.l.b16 %v217
      %v293 = vunpack.c.l.b16 %v219
      %v294 = vunpack.c.l.b16 %v220
      %v295 = vunpack.c.l.b16 %v222
      %v296 = vunpack.c.l.b16 %v223
      %v297 = vunpack.c.l.b16 %v225
      %v298 = vunpack.c.l.b16 %v226
      %v299 = vunpack.c.l.b16 %v228
      %v300 = vunpack.c.l.b16 %v229
      %v301 = vpack.c.b16 %v270, %v269
      %v302 = vpack.c.b16 %v272, %v271
      %v303 = vpack.c.b16 %v274, %v273
      %v304 = vpack.c.b16 %v276, %v275
      %v305 = vpack.c.b16 %v278, %v277
      %v306 = vpack.c.b16 %v280, %v279
      %v307 = vpack.c.b16 %v282, %v281
      %v308 = vpack.c.b16 %v284, %v283
      %v309 = vpack.c.b16 %v286, %v285
      %v310 = vpack.c.b16 %v288, %v287
      %v311 = vpack.c.b16 %v290, %v289
      %v312 = vpack.c.b16 %v292, %v291
      %v313 = vpack.c.b16 %v294, %v293
      %v314 = vpack.c.b16 %v296, %v295
      %v315 = vpack.c.b16 %v298, %v297
      %v316 = vpack.c.b16 %v300, %v299
      %vm333 = vcmask 31744
      %334 = vst.msk [vmem:[#allocation2] sm:$0xff] %vm333, %v301
      %335 = vst.msk [vmem:[#allocation2 + $0x8] sm:$0xff] %vm333, %v302
      %336 = vst.msk [vmem:[#allocation2 + $0x10] sm:$0xff] %vm333, %v303
      %337 = vst.msk [vmem:[#allocation2 + $0x18] sm:$0xff] %vm333, %v304
      %338 = vst.msk [vmem:[#allocation2 + $0x20] sm:$0xff] %vm333, %v305
      %339 = vst.msk [vmem:[#allocation2 + $0x28] sm:$0xff] %vm333, %v306
      %340 = vst.msk [vmem:[#allocation2 + $0x30] sm:$0xff] %vm333, %v307
      %341 = vst.msk [vmem:[#allocation2 + $0x38] sm:$0xff] %vm333, %v308
      %342 = vst.msk [vmem:[#allocation2 + $0x40] sm:$0xff] %vm333, %v309
      %343 = vst.msk [vmem:[#allocation2 + $0x48] sm:$0xff] %vm333, %v310
      %344 = vst.msk [vmem:[#allocation2 + $0x50] sm:$0xff] %vm333, %v311
      %345 = vst.msk [vmem:[#allocation2 + $0x58] sm:$0xff] %vm333, %v312
      %346 = vst.msk [vmem:[#allocation2 + $0x60] sm:$0xff] %vm333, %v313
      %347 = vst.msk [vmem:[#allocation2 + $0x68] sm:$0xff] %vm333, %v314
      %348 = vst.msk [vmem:[#allocation2 + $0x70] sm:$0xff] %vm333, %v315
      %349 = vst.msk [vmem:[#allocation2 + $0x78] sm:$0xff] %vm333, %v316
      %v366 = vunpack.c.l.b16 %v185
      %v367 = vunpack.c.l.b16 %v188
      %v368 = vunpack.c.l.b16 %v191
      %v369 = vunpack.c.l.b16 %v194
      %v370 = vunpack.c.l.b16 %v197
      %v371 = vunpack.c.l.b16 %v200
      %v372 = vunpack.c.l.b16 %v203
      %v373 = vunpack.c.l.b16 %v206
      %v374 = vunpack.c.l.b16 %v209
      %v375 = vunpack.c.l.b16 %v212
      %v376 = vunpack.c.l.b16 %v215
      %v377 = vunpack.c.l.b16 %v218
      %v378 = vunpack.c.l.b16 %v221
      %v379 = vunpack.c.l.b16 %v224
      %v380 = vunpack.c.l.b16 %v227
      %v381 = vunpack.c.l.b16 %v230
      %v382 = vpack.c.b16 %v366, %v366
      %v383 = vpack.c.b16 %v367, %v367
      %v384 = vpack.c.b16 %v368, %v368
      %v385 = vpack.c.b16 %v369, %v369
      %v386 = vpack.c.b16 %v370, %v370
      %v387 = vpack.c.b16 %v371, %v371
      %v388 = vpack.c.b16 %v372, %v372
      %v389 = vpack.c.b16 %v373, %v373
      %v390 = vpack.c.b16 %v374, %v374
      %v391 = vpack.c.b16 %v375, %v375
      %v392 = vpack.c.b16 %v376, %v376
      %v393 = vpack.c.b16 %v377, %v377
      %v394 = vpack.c.b16 %v378, %v378
      %v395 = vpack.c.b16 %v379, %v379
      %v396 = vpack.c.b16 %v380, %v380
      %v397 = vpack.c.b16 %v381, %v381
      %vm398 = vsmask.f32 7424
      %v400 = vshrl.u32 %v301, 16
      %v402 = vshll.u32 %v301, 16
      %v404 = vrot.slane %v402, 1
      %v405 = vor.u32 %v400, %v404
      %v407 = vshll.u32 %v382, 16
      %v409 = vrot.slane %v407, 1
      %v410 = vsel %vm398, %v405, %v409
      %v412 = vshrl.u32 %v302, 16
      %v414 = vshll.u32 %v302, 16
      %v416 = vrot.slane %v414, 1
      %v417 = vor.u32 %v412, %v416
      %v419 = vshll.u32 %v383, 16
      %v421 = vrot.slane %v419, 1
      %v422 = vsel %vm398, %v417, %v421
      %v424 = vshrl.u32 %v303, 16
      %v426 = vshll.u32 %v303, 16
      %v428 = vrot.slane %v426, 1
      %v429 = vor.u32 %v424, %v428
      %v431 = vshll.u32 %v384, 16
      %v433 = vrot.slane %v431, 1
      %v434 = vsel %vm398, %v429, %v433
      %v436 = vshrl.u32 %v304, 16
      %v438 = vshll.u32 %v304, 16
      %v440 = vrot.slane %v438, 1
      %v441 = vor.u32 %v436, %v440
      %v443 = vshll.u32 %v385, 16
      %v445 = vrot.slane %v443, 1
      %v446 = vsel %vm398, %v441, %v445
      %v448 = vshrl.u32 %v305, 16
      %v450 = vshll.u32 %v305, 16
      %v452 = vrot.slane %v450, 1
      %v453 = vor.u32 %v448, %v452
      %v455 = vshll.u32 %v386, 16
      %v457 = vrot.slane %v455, 1
      %v458 = vsel %vm398, %v453, %v457
      %v460 = vshrl.u32 %v306, 16
      %v462 = vshll.u32 %v306, 16
      %v464 = vrot.slane %v462, 1
      %v465 = vor.u32 %v460, %v464
      %v467 = vshll.u32 %v387, 16
      %v469 = vrot.slane %v467, 1
      %v470 = vsel %vm398, %v465, %v469
      %v472 = vshrl.u32 %v307, 16
      %v474 = vshll.u32 %v307, 16
      %v476 = vrot.slane %v474, 1
      %v477 = vor.u32 %v472, %v476
      %v479 = vshll.u32 %v388, 16
      %v481 = vrot.slane %v479, 1
      %v482 = vsel %vm398, %v477, %v481
      %v484 = vshrl.u32 %v308, 16
      %v486 = vshll.u32 %v308, 16
      %v488 = vrot.slane %v486, 1
      %v489 = vor.u32 %v484, %v488
      %v491 = vshll.u32 %v389, 16
      %v493 = vrot.slane %v491, 1
      %v494 = vsel %vm398, %v489, %v493
      %v496 = vshrl.u32 %v309, 16
      %v498 = vshll.u32 %v309, 16
      %v500 = vrot.slane %v498, 1
      %v501 = vor.u32 %v496, %v500
      %v503 = vshll.u32 %v390, 16
      %v505 = vrot.slane %v503, 1
      %v506 = vsel %vm398, %v501, %v505
      %v508 = vshrl.u32 %v310, 16
      %v510 = vshll.u32 %v310, 16
      %v512 = vrot.slane %v510, 1
      %v513 = vor.u32 %v508, %v512
      %v515 = vshll.u32 %v391, 16
      %v517 = vrot.slane %v515, 1
      %v518 = vsel %vm398, %v513, %v517
      %v520 = vshrl.u32 %v311, 16
      %v522 = vshll.u32 %v311, 16
      %v524 = vrot.slane %v522, 1
      %v525 = vor.u32 %v520, %v524
      %v527 = vshll.u32 %v392, 16
      %v529 = vrot.slane %v527, 1
      %v530 = vsel %vm398, %v525, %v529
      %v532 = vshrl.u32 %v312, 16
      %v534 = vshll.u32 %v312, 16
      %v536 = vrot.slane %v534, 1
      %v537 = vor.u32 %v532, %v536
      %v539 = vshll.u32 %v393, 16
      %v541 = vrot.slane %v539, 1
      %v542 = vsel %vm398, %v537, %v541
      %v544 = vshrl.u32 %v313, 16
      %v546 = vshll.u32 %v313, 16
      %v548 = vrot.slane %v546, 1
      %v549 = vor.u32 %v544, %v548
      %v551 = vshll.u32 %v394, 16
      %v553 = vrot.slane %v551, 1
      %v554 = vsel %vm398, %v549, %v553
      %v556 = vshrl.u32 %v314, 16
      %v558 = vshll.u32 %v314, 16
      %v560 = vrot.slane %v558, 1
      %v561 = vor.u32 %v556, %v560
      %v563 = vshll.u32 %v395, 16
      %v565 = vrot.slane %v563, 1
      %v566 = vsel %vm398, %v561, %v565
      %v568 = vshrl.u32 %v315, 16
      %v570 = vshll.u32 %v315, 16
      %v572 = vrot.slane %v570, 1
      %v573 = vor.u32 %v568, %v572
      %v575 = vshll.u32 %v396, 16
      %v577 = vrot.slane %v575, 1
      %v578 = vsel %vm398, %v573, %v577
      %v580 = vshrl.u32 %v316, 16
      %v582 = vshll.u32 %v316, 16
      %v584 = vrot.slane %v582, 1
      %v585 = vor.u32 %v580, %v584
      %v587 = vshll.u32 %v397, 16
      %v589 = vrot.slane %v587, 1
      %v590 = vsel %vm398, %v585, %v589
      %591 = vrot.lane.b32.xlu0 %v410, 4
      %v592 = vpop.permute.xlu0 %591
      %593 = vrot.lane.b32.xlu0 %v422, 4
      %v594 = vpop.permute.xlu0 %593
      %595 = vrot.lane.b32.xlu0 %v434, 4
      %v596 = vpop.permute.xlu0 %595
      %597 = vrot.lane.b32.xlu0 %v446, 4
      %v598 = vpop.permute.xlu0 %597
      %599 = vrot.lane.b32.xlu0 %v458, 4
      %v600 = vpop.permute.xlu0 %599
      %601 = vrot.lane.b32.xlu0 %v470, 4
      %v602 = vpop.permute.xlu0 %601
      %603 = vrot.lane.b32.xlu0 %v482, 4
      %v604 = vpop.permute.xlu0 %603
      %605 = vrot.lane.b32.xlu0 %v494, 4
      %v606 = vpop.permute.xlu0 %605
      %607 = vrot.lane.b32.xlu0 %v506, 4
      %v608 = vpop.permute.xlu0 %607
      %609 = vrot.lane.b32.xlu0 %v518, 4
      %v610 = vpop.permute.xlu0 %609
      %611 = vrot.lane.b32.xlu0 %v530, 4
      %v612 = vpop.permute.xlu0 %611
      %613 = vrot.lane.b32.xlu0 %v542, 4
      %v614 = vpop.permute.xlu0 %613
      %615 = vrot.lane.b32.xlu0 %v554, 4
      %v616 = vpop.permute.xlu0 %615
      %617 = vrot.lane.b32.xlu0 %v566, 4
      %v618 = vpop.permute.xlu0 %617
      %619 = vrot.lane.b32.xlu0 %v578, 4
      %v620 = vpop.permute.xlu0 %619
      %621 = vrot.lane.b32.xlu0 %v590, 4
      %v622 = vpop.permute.xlu0 %621
      %vm639 = vcmask 64544
      %640 = vst.msk [vmem:[#allocation2] sm:$0xff] %vm639, %v592
      %641 = vst.msk [vmem:[#allocation2 + $0x8] sm:$0xff] %vm639, %v594
      %642 = vst.msk [vmem:[#allocation2 + $0x10] sm:$0xff] %vm639, %v596
      %643 = vst.msk [vmem:[#allocation2 + $0x18] sm:$0xff] %vm639, %v598
      %644 = vst.msk [vmem:[#allocation2 + $0x20] sm:$0xff] %vm639, %v600
      %645 = vst.msk [vmem:[#allocation2 + $0x28] sm:$0xff] %vm639, %v602
      %646 = vst.msk [vmem:[#allocation2 + $0x30] sm:$0xff] %vm639, %v604
      %647 = vst.msk [vmem:[#allocation2 + $0x38] sm:$0xff] %vm639, %v606
      %648 = vst.msk [vmem:[#allocation2 + $0x40] sm:$0xff] %vm639, %v608
      %649 = vst.msk [vmem:[#allocation2 + $0x48] sm:$0xff] %vm639, %v610
      %650 = vst.msk [vmem:[#allocation2 + $0x50] sm:$0xff] %vm639, %v612
      %651 = vst.msk [vmem:[#allocation2 + $0x58] sm:$0xff] %vm639, %v614
      %652 = vst.msk [vmem:[#allocation2 + $0x60] sm:$0xff] %vm639, %v616
      %653 = vst.msk [vmem:[#allocation2 + $0x68] sm:$0xff] %vm639, %v618
      %654 = vst.msk [vmem:[#allocation2 + $0x70] sm:$0xff] %vm639, %v620
      %655 = vst.msk [vmem:[#allocation2 + $0x78] sm:$0xff] %vm639, %v622
      %vm656 = vcmask 1046528
      %v657 = vrot.slane %v301, 1
      %v658 = vrot.slane %v382, 1
      %v659 = vsel %vm656, %v657, %v658
      %v660 = vrot.slane %v302, 1
      %v661 = vrot.slane %v383, 1
      %v662 = vsel %vm656, %v660, %v661
      %v663 = vrot.slane %v303, 1
      %v664 = vrot.slane %v384, 1
      %v665 = vsel %vm656, %v663, %v664
      %v666 = vrot.slane %v304, 1
      %v667 = vrot.slane %v385, 1
      %v668 = vsel %vm656, %v666, %v667
      %v669 = vrot.slane %v305, 1
      %v670 = vrot.slane %v386, 1
      %v671 = vsel %vm656, %v669, %v670
      %v672 = vrot.slane %v306, 1
      %v673 = vrot.slane %v387, 1
      %v674 = vsel %vm656, %v672, %v673
      %v675 = vrot.slane %v307, 1
      %v676 = vrot.slane %v388, 1
      %v677 = vsel %vm656, %v675, %v676
      %v678 = vrot.slane %v308, 1
      %v679 = vrot.slane %v389, 1
      %v680 = vsel %vm656, %v678, %v679
      %v681 = vrot.slane %v309, 1
      %v682 = vrot.slane %v390, 1
      %v683 = vsel %vm656, %v681, %v682
      %v684 = vrot.slane %v310, 1
      %v685 = vrot.slane %v391, 1
      %v686 = vsel %vm656, %v684, %v685
      %v687 = vrot.slane %v311, 1
      %v688 = vrot.slane %v392, 1
      %v689 = vsel %vm656, %v687, %v688
      %v690 = vrot.slane %v312, 1
      %v691 = vrot.slane %v393, 1
      %v692 = vsel %vm656, %v690, %v691
      %v693 = vrot.slane %v313, 1
      %v694 = vrot.slane %v394, 1
      %v695 = vsel %vm656, %v693, %v694
      %v696 = vrot.slane %v314, 1
      %v697 = vrot.slane %v395, 1
      %v698 = vsel %vm656, %v696, %v697
      %v699 = vrot.slane %v315, 1
      %v700 = vrot.slane %v396, 1
      %v701 = vsel %vm656, %v699, %v700
      %v702 = vrot.slane %v316, 1
      %v703 = vrot.slane %v397, 1
      %v704 = vsel %vm656, %v702, %v703
      %705 = vrot.lane.b32.xlu0 %v659, 8
      %v706 = vpop.permute.xlu0 %705
      %707 = vrot.lane.b32.xlu0 %v662, 8
      %v708 = vpop.permute.xlu0 %707
      %709 = vrot.lane.b32.xlu0 %v665, 8
      %v710 = vpop.permute.xlu0 %709
      %711 = vrot.lane.b32.xlu0 %v668, 8
      %v712 = vpop.permute.xlu0 %711
      %713 = vrot.lane.b32.xlu0 %v671, 8
      %v714 = vpop.permute.xlu0 %713
      %715 = vrot.lane.b32.xlu0 %v674, 8
      %v716 = vpop.permute.xlu0 %715
      %717 = vrot.lane.b32.xlu0 %v677, 8
      %v718 = vpop.permute.xlu0 %717
      %719 = vrot.lane.b32.xlu0 %v680, 8
      %v720 = vpop.permute.xlu0 %719
      %721 = vrot.lane.b32.xlu0 %v683, 8
      %v722 = vpop.permute.xlu0 %721
      %723 = vrot.lane.b32.xlu0 %v686, 8
      %v724 = vpop.permute.xlu0 %723
      %725 = vrot.lane.b32.xlu0 %v689, 8
      %v726 = vpop.permute.xlu0 %725
      %727 = vrot.lane.b32.xlu0 %v692, 8
      %v728 = vpop.permute.xlu0 %727
      %729 = vrot.lane.b32.xlu0 %v695, 8
      %v730 = vpop.permute.xlu0 %729
      %731 = vrot.lane.b32.xlu0 %v698, 8
      %v732 = vpop.permute.xlu0 %731
      %733 = vrot.lane.b32.xlu0 %v701, 8
      %v734 = vpop.permute.xlu0 %733
      %735 = vrot.lane.b32.xlu0 %v704, 8
      %v736 = vpop.permute.xlu0 %735
      %vm753 = vcmask 97344
      %754 = vst.msk [vmem:[#allocation2] sm:$0xff] %vm753, %v706
      %755 = vst.msk [vmem:[#allocation2 + $0x8] sm:$0xff] %vm753, %v708
      %756 = vst.msk [vmem:[#allocation2 + $0x10] sm:$0xff] %vm753, %v710
      %757 = vst.msk [vmem:[#allocation2 + $0x18] sm:$0xff] %vm753, %v712
      %758 = vst.msk [vmem:[#allocation2 + $0x20] sm:$0xff] %vm753, %v714
      %759 = vst.msk [vmem:[#allocation2 + $0x28] sm:$0xff] %vm753, %v716
      %760 = vst.msk [vmem:[#allocation2 + $0x30] sm:$0xff] %vm753, %v718
      %761 = vst.msk [vmem:[#allocation2 + $0x38] sm:$0xff] %vm753, %v720
      %762 = vst.msk [vmem:[#allocation2 + $0x40] sm:$0xff] %vm753, %v722
      %763 = vst.msk [vmem:[#allocation2 + $0x48] sm:$0xff] %vm753, %v724
      %764 = vst.msk [vmem:[#allocation2 + $0x50] sm:$0xff] %vm753, %v726
      %765 = vst.msk [vmem:[#allocation2 + $0x58] sm:$0xff] %vm753, %v728
      %766 = vst.msk [vmem:[#allocation2 + $0x60] sm:$0xff] %vm753, %v730
      %767 = vst.msk [vmem:[#allocation2 + $0x68] sm:$0xff] %vm753, %v732
      %768 = vst.msk [vmem:[#allocation2 + $0x70] sm:$0xff] %vm753, %v734
      %769 = vst.msk [vmem:[#allocation2 + $0x78] sm:$0xff] %vm753, %v736
      %v772 = vunpack.c.l.b16 %v231
      %v773 = vunpack.c.l.b16 %v232
      %v774 = vpack.c.b16 %v773, %v772
      %775 = vrot.lane.b32.xlu0 %v302, 12
      %v776 = vpop.permute.xlu0 %775
      %777 = vrot.lane.b32.xlu0 %v303, 12
      %v778 = vpop.permute.xlu0 %777
      %779 = vrot.lane.b32.xlu0 %v304, 12
      %v780 = vpop.permute.xlu0 %779
      %781 = vrot.lane.b32.xlu0 %v305, 12
      %v782 = vpop.permute.xlu0 %781
      %783 = vrot.lane.b32.xlu0 %v306, 12
      %v784 = vpop.permute.xlu0 %783
      %785 = vrot.lane.b32.xlu0 %v307, 12
      %v786 = vpop.permute.xlu0 %785
      %787 = vrot.lane.b32.xlu0 %v308, 12
      %v788 = vpop.permute.xlu0 %787
      %789 = vrot.lane.b32.xlu0 %v309, 12
      %v790 = vpop.permute.xlu0 %789
      %791 = vrot.lane.b32.xlu0 %v310, 12
      %v792 = vpop.permute.xlu0 %791
      %793 = vrot.lane.b32.xlu0 %v311, 12
      %v794 = vpop.permute.xlu0 %793
      %795 = vrot.lane.b32.xlu0 %v312, 12
      %v796 = vpop.permute.xlu0 %795
      %797 = vrot.lane.b32.xlu0 %v313, 12
      %v798 = vpop.permute.xlu0 %797
      %799 = vrot.lane.b32.xlu0 %v314, 12
      %v800 = vpop.permute.xlu0 %799
      %801 = vrot.lane.b32.xlu0 %v315, 12
      %v802 = vpop.permute.xlu0 %801
      %803 = vrot.lane.b32.xlu0 %v316, 12
      %v804 = vpop.permute.xlu0 %803
      %805 = vrot.lane.b32.xlu0 %v774, 12
      %v806 = vpop.permute.xlu0 %805
      %vm823 = vcmask 130144
      %824 = vst.msk [vmem:[#allocation2] sm:$0xff] %vm823, %v776
      %825 = vst.msk [vmem:[#allocation2 + $0x8] sm:$0xff] %vm823, %v778
      %826 = vst.msk [vmem:[#allocation2 + $0x10] sm:$0xff] %vm823, %v780
      %827 = vst.msk [vmem:[#allocation2 + $0x18] sm:$0xff] %vm823, %v782
      %828 = vst.msk [vmem:[#allocation2 + $0x20] sm:$0xff] %vm823, %v784
      %829 = vst.msk [vmem:[#allocation2 + $0x28] sm:$0xff] %vm823, %v786
      %830 = vst.msk [vmem:[#allocation2 + $0x30] sm:$0xff] %vm823, %v788
      %831 = vst.msk [vmem:[#allocation2 + $0x38] sm:$0xff] %vm823, %v790
      %832 = vst.msk [vmem:[#allocation2 + $0x40] sm:$0xff] %vm823, %v792
      %833 = vst.msk [vmem:[#allocation2 + $0x48] sm:$0xff] %vm823, %v794
      %834 = vst.msk [vmem:[#allocation2 + $0x50] sm:$0xff] %vm823, %v796
      %835 = vst.msk [vmem:[#allocation2 + $0x58] sm:$0xff] %vm823, %v798
      %836 = vst.msk [vmem:[#allocation2 + $0x60] sm:$0xff] %vm823, %v800
      %837 = vst.msk [vmem:[#allocation2 + $0x68] sm:$0xff] %vm823, %v802
      %838 = vst.msk [vmem:[#allocation2 + $0x70] sm:$0xff] %vm823, %v804
      %839 = vst.msk [vmem:[#allocation2 + $0x78] sm:$0xff] %vm823, %v806
      %v841 = vunpack.c.l.b16 %v233
      %v842 = vpack.c.b16 %v841, %v841
      %v844 = vshrl.u32 %v774, 16
      %v846 = vshll.u32 %v774, 16
      %v848 = vrot.slane %v846, 1
      %v849 = vor.u32 %v844, %v848
      %v851 = vshll.u32 %v842, 16
      %v853 = vrot.slane %v851, 1
      %v854 = vsel %vm398, %v849, %v853
      %855 = vrot.lane.b32.xlu0 %v422, 16
      %v856 = vpop.permute.xlu0 %855
      %857 = vrot.lane.b32.xlu0 %v434, 16
      %v858 = vpop.permute.xlu0 %857
      %859 = vrot.lane.b32.xlu0 %v446, 16
      %v860 = vpop.permute.xlu0 %859
      %861 = vrot.lane.b32.xlu0 %v458, 16
      %v862 = vpop.permute.xlu0 %861
      %863 = vrot.lane.b32.xlu0 %v470, 16
      %v864 = vpop.permute.xlu0 %863
      %865 = vrot.lane.b32.xlu0 %v482, 16
      %v866 = vpop.permute.xlu0 %865
      %867 = vrot.lane.b32.xlu0 %v494, 16
      %v868 = vpop.permute.xlu0 %867
      %869 = vrot.lane.b32.xlu0 %v506, 16
      %v870 = vpop.permute.xlu0 %869
      %871 = vrot.lane.b32.xlu0 %v518, 16
      %v872 = vpop.permute.xlu0 %871
      %873 = vrot.lane.b32.xlu0 %v530, 16
      %v874 = vpop.permute.xlu0 %873
      %875 = vrot.lane.b32.xlu0 %v542, 16
      %v876 = vpop.permute.xlu0 %875
      %877 = vrot.lane.b32.xlu0 %v554, 16
      %v878 = vpop.permute.xlu0 %877
      %879 = vrot.lane.b32.xlu0 %v566, 16
      %v880 = vpop.permute.xlu0 %879
      %881 = vrot.lane.b32.xlu0 %v578, 16
      %v882 = vpop.permute.xlu0 %881
      %883 = vrot.lane.b32.xlu0 %v590, 16
      %v884 = vpop.permute.xlu0 %883
      %885 = vrot.lane.b32.xlu0 %v854, 16
      %v886 = vpop.permute.xlu0 %885
      %vm903 = vcmask 162944
      %904 = vst.msk [vmem:[#allocation2] sm:$0xff] %vm903, %v856
      %905 = vst.msk [vmem:[#allocation2 + $0x8] sm:$0xff] %vm903, %v858
      %906 = vst.msk [vmem:[#allocation2 + $0x10] sm:$0xff] %vm903, %v860
      %907 = vst.msk [vmem:[#allocation2 + $0x18] sm:$0xff] %vm903, %v862
      %908 = vst.msk [vmem:[#allocation2 + $0x20] sm:$0xff] %vm903, %v864
      %909 = vst.msk [vmem:[#allocation2 + $0x28] sm:$0xff] %vm903, %v866
      %910 = vst.msk [vmem:[#allocation2 + $0x30] sm:$0xff] %vm903, %v868
      %911 = vst.msk [vmem:[#allocation2 + $0x38] sm:$0xff] %vm903, %v870
      %912 = vst.msk [vmem:[#allocation2 + $0x40] sm:$0xff] %vm903, %v872
      %913 = vst.msk [vmem:[#allocation2 + $0x48] sm:$0xff] %vm903, %v874
      %914 = vst.msk [vmem:[#allocation2 + $0x50] sm:$0xff] %vm903, %v876
      %915 = vst.msk [vmem:[#allocation2 + $0x58] sm:$0xff] %vm903, %v878
      %916 = vst.msk [vmem:[#allocation2 + $0x60] sm:$0xff] %vm903, %v880
      %917 = vst.msk [vmem:[#allocation2 + $0x68] sm:$0xff] %vm903, %v882
      %918 = vst.msk [vmem:[#allocation2 + $0x70] sm:$0xff] %vm903, %v884
      %919 = vst.msk [vmem:[#allocation2 + $0x78] sm:$0xff] %vm903, %v886
      %v920 = vrot.slane %v774, 1
      %v921 = vrot.slane %v842, 1
      %v922 = vsel %vm656, %v920, %v921
      %923 = vrot.lane.b32.xlu0 %v662, 20
      %v924 = vpop.permute.xlu0 %923
      %925 = vrot.lane.b32.xlu0 %v665, 20
      %v926 = vpop.permute.xlu0 %925
      %927 = vrot.lane.b32.xlu0 %v668, 20
      %v928 = vpop.permute.xlu0 %927
      %929 = vrot.lane.b32.xlu0 %v671, 20
      %v930 = vpop.permute.xlu0 %929
      %931 = vrot.lane.b32.xlu0 %v674, 20
      %v932 = vpop.permute.xlu0 %931
      %933 = vrot.lane.b32.xlu0 %v677, 20
      %v934 = vpop.permute.xlu0 %933
      %935 = vrot.lane.b32.xlu0 %v680, 20
      %v936 = vpop.permute.xlu0 %935
      %937 = vrot.lane.b32.xlu0 %v683, 20
      %v938 = vpop.permute.xlu0 %937
      %939 = vrot.lane.b32.xlu0 %v686, 20
      %v940 = vpop.permute.xlu0 %939
      %941 = vrot.lane.b32.xlu0 %v689, 20
      %v942 = vpop.permute.xlu0 %941
      %943 = vrot.lane.b32.xlu0 %v692, 20
      %v944 = vpop.permute.xlu0 %943
      %945 = vrot.lane.b32.xlu0 %v695, 20
      %v946 = vpop.permute.xlu0 %945
      %947 = vrot.lane.b32.xlu0 %v698, 20
      %v948 = vpop.permute.xlu0 %947
      %949 = vrot.lane.b32.xlu0 %v701, 20
      %v950 = vpop.permute.xlu0 %949
      %951 = vrot.lane.b32.xlu0 %v704, 20
      %v952 = vpop.permute.xlu0 %951
      %953 = vrot.lane.b32.xlu0 %v922, 20
      %v954 = vpop.permute.xlu0 %953
      %vm971 = vcmask 195744
      %972 = vst.msk [vmem:[#allocation2] sm:$0xff] %vm971, %v924
      %973 = vst.msk [vmem:[#allocation2 + $0x8] sm:$0xff] %vm971, %v926
      %974 = vst.msk [vmem:[#allocation2 + $0x10] sm:$0xff] %vm971, %v928
      %975 = vst.msk [vmem:[#allocation2 + $0x18] sm:$0xff] %vm971, %v930
      %976 = vst.msk [vmem:[#allocation2 + $0x20] sm:$0xff] %vm971, %v932
      %977 = vst.msk [vmem:[#allocation2 + $0x28] sm:$0xff] %vm971, %v934
      %978 = vst.msk [vmem:[#allocation2 + $0x30] sm:$0xff] %vm971, %v936
      %979 = vst.msk [vmem:[#allocation2 + $0x38] sm:$0xff] %vm971, %v938
      %980 = vst.msk [vmem:[#allocation2 + $0x40] sm:$0xff] %vm971, %v940
      %981 = vst.msk [vmem:[#allocation2 + $0x48] sm:$0xff] %vm971, %v942
      %982 = vst.msk [vmem:[#allocation2 + $0x50] sm:$0xff] %vm971, %v944
      %983 = vst.msk [vmem:[#allocation2 + $0x58] sm:$0xff] %vm971, %v946
      %984 = vst.msk [vmem:[#allocation2 + $0x60] sm:$0xff] %vm971, %v948
      %985 = vst.msk [vmem:[#allocation2 + $0x68] sm:$0xff] %vm971, %v950
      %986 = vst.msk [vmem:[#allocation2 + $0x70] sm:$0xff] %vm971, %v952
      %987 = vst.msk [vmem:[#allocation2 + $0x78] sm:$0xff] %vm971, %v954
      %v990 = vunpack.c.l.b16 %v234
      %v991 = vunpack.c.l.b16 %v235
      %v992 = vpack.c.b16 %v991, %v990
      %993 = vrot.lane.b32.xlu0 %v303, 24
      %v994 = vpop.permute.xlu0 %993
      %995 = vrot.lane.b32.xlu0 %v304, 24
      %v996 = vpop.permute.xlu0 %995
      %997 = vrot.lane.b32.xlu0 %v305, 24
      %v998 = vpop.permute.xlu0 %997
      %999 = vrot.lane.b32.xlu0 %v306, 24
      %v1000 = vpop.permute.xlu0 %999
      %1001 = vrot.lane.b32.xlu0 %v307, 24
      %v1002 = vpop.permute.xlu0 %1001
      %1003 = vrot.lane.b32.xlu0 %v308, 24
      %v1004 = vpop.permute.xlu0 %1003
      %1005 = vrot.lane.b32.xlu0 %v309, 24
      %v1006 = vpop.permute.xlu0 %1005
      %1007 = vrot.lane.b32.xlu0 %v310, 24
      %v1008 = vpop.permute.xlu0 %1007
      %1009 = vrot.lane.b32.xlu0 %v311, 24
      %v1010 = vpop.permute.xlu0 %1009
      %1011 = vrot.lane.b32.xlu0 %v312, 24
      %v1012 = vpop.permute.xlu0 %1011
      %1013 = vrot.lane.b32.xlu0 %v313, 24
      %v1014 = vpop.permute.xlu0 %1013
      %1015 = vrot.lane.b32.xlu0 %v314, 24
      %v1016 = vpop.permute.xlu0 %1015
      %1017 = vrot.lane.b32.xlu0 %v315, 24
      %v1018 = vpop.permute.xlu0 %1017
      %1019 = vrot.lane.b32.xlu0 %v316, 24
      %v1020 = vpop.permute.xlu0 %1019
      %1021 = vrot.lane.b32.xlu0 %v774, 24
      %v1022 = vpop.permute.xlu0 %1021
      %1023 = vrot.lane.b32.xlu0 %v992, 24
      %v1024 = vpop.permute.xlu0 %1023
      %vm1041 = vcmask 228544
      %1042 = vst.msk [vmem:[#allocation2] sm:$0xff] %vm1041, %v994
      %1043 = vst.msk [vmem:[#allocation2 + $0x8] sm:$0xff] %vm1041, %v996
      %1044 = vst.msk [vmem:[#allocation2 + $0x10] sm:$0xff] %vm1041, %v998
      %1045 = vst.msk [vmem:[#allocation2 + $0x18] sm:$0xff] %vm1041, %v1000
      %1046 = vst.msk [vmem:[#allocation2 + $0x20] sm:$0xff] %vm1041, %v1002
      %1047 = vst.msk [vmem:[#allocation2 + $0x28] sm:$0xff] %vm1041, %v1004
      %1048 = vst.msk [vmem:[#allocation2 + $0x30] sm:$0xff] %vm1041, %v1006
      %1049 = vst.msk [vmem:[#allocation2 + $0x38] sm:$0xff] %vm1041, %v1008
      %1050 = vst.msk [vmem:[#allocation2 + $0x40] sm:$0xff] %vm1041, %v1010
      %1051 = vst.msk [vmem:[#allocation2 + $0x48] sm:$0xff] %vm1041, %v1012
      %1052 = vst.msk [vmem:[#allocation2 + $0x50] sm:$0xff] %vm1041, %v1014
      %1053 = vst.msk [vmem:[#allocation2 + $0x58] sm:$0xff] %vm1041, %v1016
      %1054 = vst.msk [vmem:[#allocation2 + $0x60] sm:$0xff] %vm1041, %v1018
      %1055 = vst.msk [vmem:[#allocation2 + $0x68] sm:$0xff] %vm1041, %v1020
      %1056 = vst.msk [vmem:[#allocation2 + $0x70] sm:$0xff] %vm1041, %v1022
      %1057 = vst.msk [vmem:[#allocation2 + $0x78] sm:$0xff] %vm1041, %v1024
      %v1059 = vunpack.c.l.b16 %v236
      %v1060 = vpack.c.b16 %v1059, %v1059
      %v1062 = vshrl.u32 %v992, 16
      %v1064 = vshll.u32 %v992, 16
      %v1066 = vrot.slane %v1064, 1
      %v1067 = vor.u32 %v1062, %v1066
      %v1069 = vshll.u32 %v1060, 16
      %v1071 = vrot.slane %v1069, 1
      %v1072 = vsel %vm398, %v1067, %v1071
      %1073 = vrot.lane.b32.xlu0 %v434, 28
      %v1074 = vpop.permute.xlu0 %1073
      %1075 = vrot.lane.b32.xlu0 %v446, 28
      %v1076 = vpop.permute.xlu0 %1075
      %1077 = vrot.lane.b32.xlu0 %v458, 28
      %v1078 = vpop.permute.xlu0 %1077
      %1079 = vrot.lane.b32.xlu0 %v470, 28
      %v1080 = vpop.permute.xlu0 %1079
      %1081 = vrot.lane.b32.xlu0 %v482, 28
      %v1082 = vpop.permute.xlu0 %1081
      %1083 = vrot.lane.b32.xlu0 %v494, 28
      %v1084 = vpop.permute.xlu0 %1083
      %1085 = vrot.lane.b32.xlu0 %v506, 28
      %v1086 = vpop.permute.xlu0 %1085
      %1087 = vrot.lane.b32.xlu0 %v518, 28
      %v1088 = vpop.permute.xlu0 %1087
      %1089 = vrot.lane.b32.xlu0 %v530, 28
      %v1090 = vpop.permute.xlu0 %1089
      %1091 = vrot.lane.b32.xlu0 %v542, 28
      %v1092 = vpop.permute.xlu0 %1091
      %1093 = vrot.lane.b32.xlu0 %v554, 28
      %v1094 = vpop.permute.xlu0 %1093
      %1095 = vrot.lane.b32.xlu0 %v566, 28
      %v1096 = vpop.permute.xlu0 %1095
      %1097 = vrot.lane.b32.xlu0 %v578, 28
      %v1098 = vpop.permute.xlu0 %1097
      %1099 = vrot.lane.b32.xlu0 %v590, 28
      %v1100 = vpop.permute.xlu0 %1099
      %1101 = vrot.lane.b32.xlu0 %v854, 28
      %v1102 = vpop.permute.xlu0 %1101
      %1103 = vrot.lane.b32.xlu0 %v1072, 28
      %v1104 = vpop.permute.xlu0 %1103
      %vm1121 = vcmask 261344
      %1122 = vst.msk [vmem:[#allocation2] sm:$0xff] %vm1121, %v1074
      %1123 = vst.msk [vmem:[#allocation2 + $0x8] sm:$0xff] %vm1121, %v1076
      %1124 = vst.msk [vmem:[#allocation2 + $0x10] sm:$0xff] %vm1121, %v1078
      %1125 = vst.msk [vmem:[#allocation2 + $0x18] sm:$0xff] %vm1121, %v1080
      %1126 = vst.msk [vmem:[#allocation2 + $0x20] sm:$0xff] %vm1121, %v1082
      %1127 = vst.msk [vmem:[#allocation2 + $0x28] sm:$0xff] %vm1121, %v1084
      %1128 = vst.msk [vmem:[#allocation2 + $0x30] sm:$0xff] %vm1121, %v1086
      %1129 = vst.msk [vmem:[#allocation2 + $0x38] sm:$0xff] %vm1121, %v1088
      %1130 = vst.msk [vmem:[#allocation2 + $0x40] sm:$0xff] %vm1121, %v1090
      %1131 = vst.msk [vmem:[#allocation2 + $0x48] sm:$0xff] %vm1121, %v1092
      %1132 = vst.msk [vmem:[#allocation2 + $0x50] sm:$0xff] %vm1121, %v1094
      %1133 = vst.msk [vmem:[#allocation2 + $0x58] sm:$0xff] %vm1121, %v1096
      %1134 = vst.msk [vmem:[#allocation2 + $0x60] sm:$0xff] %vm1121, %v1098
      %1135 = vst.msk [vmem:[#allocation2 + $0x68] sm:$0xff] %vm1121, %v1100
      %1136 = vst.msk [vmem:[#allocation2 + $0x70] sm:$0xff] %vm1121, %v1102
      %1137 = vst.msk [vmem:[#allocation2 + $0x78] sm:$0xff] %vm1121, %v1104
      %v1138 = vrot.slane %v992, 1
      %v1139 = vrot.slane %v1060, 1
      %v1140 = vsel %vm656, %v1138, %v1139
      %1141 = vrot.lane.b32.xlu0 %v665, 32
      %v1142 = vpop.permute.xlu0 %1141
      %1143 = vrot.lane.b32.xlu0 %v668, 32
      %v1144 = vpop.permute.xlu0 %1143
      %1145 = vrot.lane.b32.xlu0 %v671, 32
      %v1146 = vpop.permute.xlu0 %1145
      %1147 = vrot.lane.b32.xlu0 %v674, 32
      %v1148 = vpop.permute.xlu0 %1147
      %1149 = vrot.lane.b32.xlu0 %v677, 32
      %v1150 = vpop.permute.xlu0 %1149
      %1151 = vrot.lane.b32.xlu0 %v680, 32
      %v1152 = vpop.permute.xlu0 %1151
      %1153 = vrot.lane.b32.xlu0 %v683, 32
      %v1154 = vpop.permute.xlu0 %1153
      %1155 = vrot.lane.b32.xlu0 %v686, 32
      %v1156 = vpop.permute.xlu0 %1155
      %1157 = vrot.lane.b32.xlu0 %v689, 32
      %v1158 = vpop.permute.xlu0 %1157
      %1159 = vrot.lane.b32.xlu0 %v692, 32
      %v1160 = vpop.permute.xlu0 %1159
      %1161 = vrot.lane.b32.xlu0 %v695, 32
      %v1162 = vpop.permute.xlu0 %1161
      %1163 = vrot.lane.b32.xlu0 %v698, 32
      %v1164 = vpop.permute.xlu0 %1163
      %1165 = vrot.lane.b32.xlu0 %v701, 32
      %v1166 = vpop.permute.xlu0 %1165
      %1167 = vrot.lane.b32.xlu0 %v704, 32
      %v1168 = vpop.permute.xlu0 %1167
      %1169 = vrot.lane.b32.xlu0 %v922, 32
      %v1170 = vpop.permute.xlu0 %1169
      %1171 = vrot.lane.b32.xlu0 %v1140, 32
      %v1172 = vpop.permute.xlu0 %1171
      %vm1189 = vcmask 294144
      %1190 = vst.msk [vmem:[#allocation2] sm:$0xff] %vm1189, %v1142
      %1191 = vst.msk [vmem:[#allocation2 + $0x8] sm:$0xff] %vm1189, %v1144
      %1192 = vst.msk [vmem:[#allocation2 + $0x10] sm:$0xff] %vm1189, %v1146
      %1193 = vst.msk [vmem:[#allocation2 + $0x18] sm:$0xff] %vm1189, %v1148
      %1194 = vst.msk [vmem:[#allocation2 + $0x20] sm:$0xff] %vm1189, %v1150
      %1195 = vst.msk [vmem:[#allocation2 + $0x28] sm:$0xff] %vm1189, %v1152
      %1196 = vst.msk [vmem:[#allocation2 + $0x30] sm:$0xff] %vm1189, %v1154
      %1197 = vst.msk [vmem:[#allocation2 + $0x38] sm:$0xff] %vm1189, %v1156
      %1198 = vst.msk [vmem:[#allocation2 + $0x40] sm:$0xff] %vm1189, %v1158
      %1199 = vst.msk [vmem:[#allocation2 + $0x48] sm:$0xff] %vm1189, %v1160
      %1200 = vst.msk [vmem:[#allocation2 + $0x50] sm:$0xff] %vm1189, %v1162
      %1201 = vst.msk [vmem:[#allocation2 + $0x58] sm:$0xff] %vm1189, %v1164
      %1202 = vst.msk [vmem:[#allocation2 + $0x60] sm:$0xff] %vm1189, %v1166
      %1203 = vst.msk [vmem:[#allocation2 + $0x68] sm:$0xff] %vm1189, %v1168
      %1204 = vst.msk [vmem:[#allocation2 + $0x70] sm:$0xff] %vm1189, %v1170
      %1205 = vst.msk [vmem:[#allocation2 + $0x78] sm:$0xff] %vm1189, %v1172
      %v1206 = vld [vmem:[#allocation2] sm:$0xff]
      %v1207 = vld [vmem:[#allocation2 + $0x8] sm:$0xff]
      %v1208 = vld [vmem:[#allocation2 + $0x10] sm:$0xff]
      %v1209 = vld [vmem:[#allocation2 + $0x18] sm:$0xff]
      %v1210 = vld [vmem:[#allocation2 + $0x20] sm:$0xff]
      %v1211 = vld [vmem:[#allocation2 + $0x28] sm:$0xff]
      %v1212 = vld [vmem:[#allocation2 + $0x30] sm:$0xff]
      %v1213 = vld [vmem:[#allocation2 + $0x38] sm:$0xff]
      %v1214 = vld [vmem:[#allocation2 + $0x40] sm:$0xff]
      %v1215 = vld [vmem:[#allocation2 + $0x48] sm:$0xff]
      %v1216 = vld [vmem:[#allocation2 + $0x50] sm:$0xff]
      %v1217 = vld [vmem:[#allocation2 + $0x58] sm:$0xff]
      %v1218 = vld [vmem:[#allocation2 + $0x60] sm:$0xff]
      %v1219 = vld [vmem:[#allocation2 + $0x68] sm:$0xff]
      %v1220 = vld [vmem:[#allocation2 + $0x70] sm:$0xff]
      %v1221 = vld [vmem:[#allocation2 + $0x78] sm:$0xff]
      %v1222 = vld [vmem:[%s1] sm:$0xf]
      %v1223 = vld [vmem:[%s1 + $0x4] sm:$0xf]
      %v1224 = vld [vmem:[%s1 + $0x8] sm:$0xf]
      %v1225 = vld [vmem:[%s1 + $0xc] sm:$0xf]
      %v1226 = vld [vmem:[%s1 + $0x10] sm:$0x3]
      %v1232 = vunpack.c.l.b16 %v1222
      %v1233 = vunpack.c.l.b16 %v1223
      %v1234 = vunpack.c.l.b16 %v1224
      %v1235 = vunpack.c.l.b16 %v1225
      %v1236 = vunpack.c.l.b16 %v1226
      %v1237 = vpack.c.b16 %v1233, %v1232
      %v1238 = vpack.c.b16 %v1235, %v1234
      %v1239 = vpack.c.b16 %v1236, %v1236
      %vm1242 = vcmask 293888
      %v1244 = vsel %vm1242, %v1206, 0
      %v1247 = vsel %vm1242, %v1207, 0
      %v1250 = vsel %vm1242, %v1208, 0
      %v1253 = vsel %vm1242, %v1209, 0
      %v1256 = vsel %vm1242, %v1210, 0
      %v1259 = vsel %vm1242, %v1211, 0
      %v1262 = vsel %vm1242, %v1212, 0
      %v1265 = vsel %vm1242, %v1213, 0
      %v1268 = vsel %vm1242, %v1214, 0
      %v1271 = vsel %vm1242, %v1215, 0
      %v1274 = vsel %vm1242, %v1216, 0
      %v1277 = vsel %vm1242, %v1217, 0
      %v1280 = vsel %vm1242, %v1218, 0
      %v1283 = vsel %vm1242, %v1219, 0
      %v1286 = vsel %vm1242, %v1220, 0
      %v1289 = vsel %vm1242, %v1221, 0
      %vm1291 = vcmask 1041408
      %v1293 = vsel %vm1291, %v1239, 0
      %1295 = vmatprep.subr.bf16.mxu0 0
      %1296 = vmatpush1.bf16.msra.mxu0 %v1237
      %1297 = vmatprep.subr.bf16.mxu0 0
      %1298 = vmatpush1.bf16.msra.mxu0 %v1238
      %1299 = vmatprep.subr.bf16.mxu0 0
      %1300 = vmatpush1.bf16.msra.mxu0 %v1293
      %1301 = vmatprep.subr.bf16.mxu0 0
      %1302 = vmatpush1.bf16.msra.mxu0 0
      %1303 = vmatprep.subr.bf16.mxu0 0
      %1304 = vmatpush1.bf16.msra.mxu0 0
      %1305 = vmatprep.subr.bf16.mxu0 0
      %1306 = vmatpush1.bf16.msra.mxu0 0
      %1307 = vmatprep.subr.bf16.mxu0 0
      %1308 = vmatpush1.bf16.msra.mxu0 0
      %1309 = vmatprep.subr.bf16.mxu0 0
      %1310 = vmatpush1.bf16.msra.mxu0 0
      %1311 = vmatprep.subr.bf16.mxu0 0
      %1312 = vmatpush1.bf16.msra.mxu0 0
      %1313 = vmatprep.subr.bf16.mxu0 0
      %1314 = vmatpush1.bf16.msra.mxu0 0
      %1315 = vmatprep.subr.bf16.mxu0 0
      %1316 = vmatpush1.bf16.msra.mxu0 0
      %1317 = vmatprep.subr.bf16.mxu0 0
      %1318 = vmatpush1.bf16.msra.mxu0 0
      %1319 = vmatprep.subr.bf16.mxu0 0
      %1320 = vmatpush1.bf16.msra.mxu0 0
      %1321 = vmatprep.subr.bf16.mxu0 0
      %1322 = vmatpush1.bf16.msra.mxu0 0
      %1323 = vmatprep.subr.bf16.mxu0 0
      %1324 = vmatpush1.bf16.msra.mxu0 0
      %1325 = vmatprep.subr.bf16.mxu0 0
      %1326 = vmatpush1.bf16.msra.mxu0 0
      %1327 = vmatprep.mubr.bf16.mxu0 0
      %1328 = vmatmul.mubr.bf16.gmra.mrb[0].mxu0 %v1244
      %v1329 = vpop.f32.mrb[0].mxu0
      %v1330 = vadd.f32 0.0, %v1329
      %v1331 = vpop.f32.mrb[0].mxu0
      %v1332 = vpop.f32.mrb[0].mxu0
      %v1333 = vadd.f32 0.0, %v1332
      %v1334 = vpop.f32.mrb[0].mxu0
      %1335 = vmatprep.mubr.bf16.mxu0 0
      %1336 = vmatmul.mubr.bf16.gmra.mrb[0].mxu0 %v1247
      %v1337 = vpop.f32.mrb[0].mxu0
      %v1338 = vadd.f32 0.0, %v1337
      %v1339 = vpop.f32.mrb[0].mxu0
      %v1340 = vpop.f32.mrb[0].mxu0
      %v1341 = vadd.f32 0.0, %v1340
      %v1342 = vpop.f32.mrb[0].mxu0
      %1343 = vmatprep.mubr.bf16.mxu0 0
      %1344 = vmatmul.mubr.bf16.gmra.mrb[0].mxu0 %v1250
      %v1345 = vpop.f32.mrb[0].mxu0
      %v1346 = vadd.f32 0.0, %v1345
      %v1347 = vpop.f32.mrb[0].mxu0
      %v1348 = vpop.f32.mrb[0].mxu0
      %v1349 = vadd.f32 0.0, %v1348
      %v1350 = vpop.f32.mrb[0].mxu0
      %1351 = vmatprep.mubr.bf16.mxu0 0
      %1352 = vmatmul.mubr.bf16.gmra.mrb[0].mxu0 %v1253
      %v1353 = vpop.f32.mrb[0].mxu0
      %v1354 = vadd.f32 0.0, %v1353
      %v1355 = vpop.f32.mrb[0].mxu0
      %v1356 = vpop.f32.mrb[0].mxu0
      %v1357 = vadd.f32 0.0, %v1356
      %v1358 = vpop.f32.mrb[0].mxu0
      %1359 = vmatprep.mubr.bf16.mxu0 0
      %1360 = vmatmul.mubr.bf16.gmra.mrb[0].mxu0 %v1256
      %v1361 = vpop.f32.mrb[0].mxu0
      %v1362 = vadd.f32 0.0, %v1361
      %v1363 = vpop.f32.mrb[0].mxu0
      %v1364 = vpop.f32.mrb[0].mxu0
      %v1365 = vadd.f32 0.0, %v1364
      %v1366 = vpop.f32.mrb[0].mxu0
      %1367 = vmatprep.mubr.bf16.mxu0 0
      %1368 = vmatmul.mubr.bf16.gmra.mrb[0].mxu0 %v1259
      %v1369 = vpop.f32.mrb[0].mxu0
      %v1370 = vadd.f32 0.0, %v1369
      %v1371 = vpop.f32.mrb[0].mxu0
      %v1372 = vpop.f32.mrb[0].mxu0
      %v1373 = vadd.f32 0.0, %v1372
      %v1374 = vpop.f32.mrb[0].mxu0
      %1375 = vmatprep.mubr.bf16.mxu0 0
      %1376 = vmatmul.mubr.bf16.gmra.mrb[0].mxu0 %v1262
      %v1377 = vpop.f32.mrb[0].mxu0
      %v1378 = vadd.f32 0.0, %v1377
      %v1379 = vpop.f32.mrb[0].mxu0
      %v1380 = vpop.f32.mrb[0].mxu0
      %v1381 = vadd.f32 0.0, %v1380
      %v1382 = vpop.f32.mrb[0].mxu0
      %1383 = vmatprep.mubr.bf16.mxu0 0
      %1384 = vmatmul.mubr.bf16.gmra.mrb[0].mxu0 %v1265
      %v1385 = vpop.f32.mrb[0].mxu0
      %v1386 = vadd.f32 0.0, %v1385
      %v1387 = vpop.f32.mrb[0].mxu0
      %v1388 = vpop.f32.mrb[0].mxu0
      %v1389 = vadd.f32 0.0, %v1388
      %v1390 = vpop.f32.mrb[0].mxu0
      %1391 = vmatprep.mubr.bf16.mxu0 0
      %1392 = vmatmul.mubr.bf16.gmra.mrb[0].mxu0 %v1268
      %v1393 = vpop.f32.mrb[0].mxu0
      %v1394 = vadd.f32 0.0, %v1393
      %v1395 = vpop.f32.mrb[0].mxu0
      %v1396 = vpop.f32.mrb[0].mxu0
      %v1397 = vadd.f32 0.0, %v1396
      %v1398 = vpop.f32.mrb[0].mxu0
      %1399 = vmatprep.mubr.bf16.mxu0 0
      %1400 = vmatmul.mubr.bf16.gmra.mrb[0].mxu0 %v1271
      %v1401 = vpop.f32.mrb[0].mxu0
      %v1402 = vadd.f32 0.0, %v1401
      %v1403 = vpop.f32.mrb[0].mxu0
      %v1404 = vpop.f32.mrb[0].mxu0
      %v1405 = vadd.f32 0.0, %v1404
      %v1406 = vpop.f32.mrb[0].mxu0
      %1407 = vmatprep.mubr.bf16.mxu0 0
      %1408 = vmatmul.mubr.bf16.gmra.mrb[0].mxu0 %v1274
      %v1409 = vpop.f32.mrb[0].mxu0
      %v1410 = vadd.f32 0.0, %v1409
      %v1411 = vpop.f32.mrb[0].mxu0
      %v1412 = vpop.f32.mrb[0].mxu0
      %v1413 = vadd.f32 0.0, %v1412
      %v1414 = vpop.f32.mrb[0].mxu0
      %1415 = vmatprep.mubr.bf16.mxu0 0
      %1416 = vmatmul.mubr.bf16.gmra.mrb[0].mxu0 %v1277
      %v1417 = vpop.f32.mrb[0].mxu0
      %v1418 = vadd.f32 0.0, %v1417
      %v1419 = vpop.f32.mrb[0].mxu0
      %v1420 = vpop.f32.mrb[0].mxu0
      %v1421 = vadd.f32 0.0, %v1420
      %v1422 = vpop.f32.mrb[0].mxu0
      %1423 = vmatprep.mubr.bf16.mxu0 0
      %1424 = vmatmul.mubr.bf16.gmra.mrb[0].mxu0 %v1280
      %v1425 = vpop.f32.mrb[0].mxu0
      %v1426 = vadd.f32 0.0, %v1425
      %v1427 = vpop.f32.mrb[0].mxu0
      %v1428 = vpop.f32.mrb[0].mxu0
      %v1429 = vadd.f32 0.0, %v1428
      %v1430 = vpop.f32.mrb[0].mxu0
      %1431 = vmatprep.mubr.bf16.mxu0 0
      %1432 = vmatmul.mubr.bf16.gmra.mrb[0].mxu0 %v1283
      %v1433 = vpop.f32.mrb[0].mxu0
      %v1434 = vadd.f32 0.0, %v1433
      %v1435 = vpop.f32.mrb[0].mxu0
      %v1436 = vpop.f32.mrb[0].mxu0
      %v1437 = vadd.f32 0.0, %v1436
      %v1438 = vpop.f32.mrb[0].mxu0
      %1439 = vmatprep.mubr.bf16.mxu0 0
      %1440 = vmatmul.mubr.bf16.gmra.mrb[0].mxu0 %v1286
      %v1441 = vpop.f32.mrb[0].mxu0
      %v1442 = vadd.f32 0.0, %v1441
      %v1443 = vpop.f32.mrb[0].mxu0
      %v1444 = vpop.f32.mrb[0].mxu0
      %v1445 = vadd.f32 0.0, %v1444
      %v1446 = vpop.f32.mrb[0].mxu0
      %1447 = vmatprep.mubr.bf16.mxu0 0
      %1448 = vmatmul.mubr.bf16.gmra.mrb[0].mxu0 %v1289
      %v1449 = vpop.f32.mrb[0].mxu0
      %v1450 = vadd.f32 0.0, %v1449
      %v1451 = vpop.f32.mrb[0].mxu0
      %v1452 = vpop.f32.mrb[0].mxu0
      %v1453 = vadd.f32 0.0, %v1452
      %v1454 = vpop.f32.mrb[0].mxu0
      %1455 = vdwg.mxu0
      %vm1456 = vcmask 64512
      %1457 = vst.msk [vmem:[%s177] sm:$0xff] %vm1456, %v1330
      %1458 = vst.msk [vmem:[%s177 + $0x8] sm:$0xff] %vm1456, %v1333
      %1459 = vst.msk [vmem:[%s177 + $0x10] sm:$0xff] %vm1456, %v1338
      %1460 = vst.msk [vmem:[%s177 + $0x18] sm:$0xff] %vm1456, %v1341
      %1461 = vst.msk [vmem:[%s177 + $0x20] sm:$0xff] %vm1456, %v1346
      %1462 = vst.msk [vmem:[%s177 + $0x28] sm:$0xff] %vm1456, %v1349
      %1463 = vst.msk [vmem:[%s177 + $0x30] sm:$0xff] %vm1456, %v1354
      %1464 = vst.msk [vmem:[%s177 + $0x38] sm:$0xff] %vm1456, %v1357
      %1465 = vst.msk [vmem:[%s177 + $0x40] sm:$0xff] %vm1456, %v1362
      %1466 = vst.msk [vmem:[%s177 + $0x48] sm:$0xff] %vm1456, %v1365
      %1467 = vst.msk [vmem:[%s177 + $0x50] sm:$0xff] %vm1456, %v1370
      %1468 = vst.msk [vmem:[%s177 + $0x58] sm:$0xff] %vm1456, %v1373
      %1469 = vst.msk [vmem:[%s177 + $0x60] sm:$0xff] %vm1456, %v1378
      %1470 = vst.msk [vmem:[%s177 + $0x68] sm:$0xff] %vm1456, %v1381
      %1471 = vst.msk [vmem:[%s177 + $0x70] sm:$0xff] %vm1456, %v1386
      %1472 = vst.msk [vmem:[%s177 + $0x78] sm:$0xff] %vm1456, %v1389
      %1473 = vst.msk [vmem:[%s177 + $0x80] sm:$0xff] %vm1456, %v1394
      %1474 = vst.msk [vmem:[%s177 + $0x88] sm:$0xff] %vm1456, %v1397
      %1475 = vst.msk [vmem:[%s177 + $0x90] sm:$0xff] %vm1456, %v1402
      %1476 = vst.msk [vmem:[%s177 + $0x98] sm:$0xff] %vm1456, %v1405
      %1477 = vst.msk [vmem:[%s177 + $0xa0] sm:$0xff] %vm1456, %v1410
      %1478 = vst.msk [vmem:[%s177 + $0xa8] sm:$0xff] %vm1456, %v1413
      %1479 = vst.msk [vmem:[%s177 + $0xb0] sm:$0xff] %vm1456, %v1418
      %1480 = vst.msk [vmem:[%s177 + $0xb8] sm:$0xff] %vm1456, %v1421
      %1481 = vst.msk [vmem:[%s177 + $0xc0] sm:$0xff] %vm1456, %v1426
      %1482 = vst.msk [vmem:[%s177 + $0xc8] sm:$0xff] %vm1456, %v1429
      %1483 = vst.msk [vmem:[%s177 + $0xd0] sm:$0xff] %vm1456, %v1434
      %1484 = vst.msk [vmem:[%s177 + $0xd8] sm:$0xff] %vm1456, %v1437
      %1485 = vst.msk [vmem:[%s177 + $0xe0] sm:$0xff] %vm1456, %v1442
      %1486 = vst.msk [vmem:[%s177 + $0xe8] sm:$0xff] %vm1456, %v1445
      %1487 = vst.msk [vmem:[%s177 + $0xf0] sm:$0xff] %vm1456, %v1450
      %1488 = vst.msk [vmem:[%s177 + $0xf8] sm:$0xff] %vm1456, %v1453
      %v1489 = vsel %vm1456, %v1330, 0.0
      %v1490 = vsel %vm1456, %v1333, 0.0
      %v1491 = vadd.f32 %v1489, %v1490
      %v1492 = vsel %vm1456, %v1338, 0.0
      %v1493 = vadd.f32 %v1491, %v1492
      %v1494 = vsel %vm1456, %v1341, 0.0
      %v1495 = vadd.f32 %v1493, %v1494
      %v1496 = vsel %vm1456, %v1346, 0.0
      %v1497 = vadd.f32 %v1495, %v1496
      %v1498 = vsel %vm1456, %v1349, 0.0
      %v1499 = vadd.f32 %v1497, %v1498
      %v1500 = vsel %vm1456, %v1354, 0.0
      %v1501 = vadd.f32 %v1499, %v1500
      %v1502 = vsel %vm1456, %v1357, 0.0
      %v1503 = vadd.f32 %v1501, %v1502
      %v1504 = vsel %vm1456, %v1362, 0.0
      %v1505 = vadd.f32 %v1503, %v1504
      %v1506 = vsel %vm1456, %v1365, 0.0
      %v1507 = vadd.f32 %v1505, %v1506
      %v1508 = vsel %vm1456, %v1370, 0.0
      %v1509 = vadd.f32 %v1507, %v1508
      %v1510 = vsel %vm1456, %v1373, 0.0
      %v1511 = vadd.f32 %v1509, %v1510
      %v1512 = vsel %vm1456, %v1378, 0.0
      %v1513 = vadd.f32 %v1511, %v1512
      %v1514 = vsel %vm1456, %v1381, 0.0
      %v1515 = vadd.f32 %v1513, %v1514
      %v1516 = vsel %vm1456, %v1386, 0.0
      %v1517 = vadd.f32 %v1515, %v1516
      %v1518 = vsel %vm1456, %v1389, 0.0
      %v1519 = vadd.f32 %v1517, %v1518
      %v1520 = vsel %vm1456, %v1394, 0.0
      %v1521 = vadd.f32 %v1519, %v1520
      %v1522 = vsel %vm1456, %v1397, 0.0
      %v1523 = vadd.f32 %v1521, %v1522
      %v1524 = vsel %vm1456, %v1402, 0.0
      %v1525 = vadd.f32 %v1523, %v1524
      %v1526 = vsel %vm1456, %v1405, 0.0
      %v1527 = vadd.f32 %v1525, %v1526
      %v1528 = vsel %vm1456, %v1410, 0.0
      %v1529 = vadd.f32 %v1527, %v1528
      %v1530 = vsel %vm1456, %v1413, 0.0
      %v1531 = vadd.f32 %v1529, %v1530
      %v1532 = vsel %vm1456, %v1418, 0.0
      %v1533 = vadd.f32 %v1531, %v1532
      %v1534 = vsel %vm1456, %v1421, 0.0
      %v1535 = vadd.f32 %v1533, %v1534
      %v1536 = vsel %vm1456, %v1426, 0.0
      %v1537 = vadd.f32 %v1535, %v1536
      %v1538 = vsel %vm1456, %v1429, 0.0
      %v1539 = vadd.f32 %v1537, %v1538
      %v1540 = vsel %vm1456, %v1434, 0.0
      %v1541 = vadd.f32 %v1539, %v1540
      %v1542 = vsel %vm1456, %v1437, 0.0
      %v1543 = vadd.f32 %v1541, %v1542
      %v1544 = vsel %vm1456, %v1442, 0.0
      %v1545 = vadd.f32 %v1543, %v1544
      %v1546 = vsel %vm1456, %v1445, 0.0
      %v1547 = vadd.f32 %v1545, %v1546
      %v1548 = vsel %vm1456, %v1450, 0.0
      %v1549 = vadd.f32 %v1547, %v1548
      %v1550 = vsel %vm1456, %v1453, 0.0
      %v1551 = vadd.f32 %v1549, %v1550
      %v1552 = vrot.slane %v1551, 4
      %v1553 = vadd.f32 %v1551, %v1552
      %v1554 = vrot.slane %v1553, 2
      %v1555 = vadd.f32 %v1553, %v1554
      %v1556 = vrot.slane %v1555, 1
      %v1557 = vadd.f32 %v1555, %v1556
      %v1558 = vmul.f32 %v1330, %v1330
      %v1559 = vmul.f32 %v1333, %v1333
      %v1560 = vmul.f32 %v1338, %v1338
      %v1561 = vmul.f32 %v1341, %v1341
      %v1562 = vmul.f32 %v1346, %v1346
      %v1563 = vmul.f32 %v1349, %v1349
      %v1564 = vmul.f32 %v1354, %v1354
      %v1565 = vmul.f32 %v1357, %v1357
      %v1566 = vmul.f32 %v1362, %v1362
      %v1567 = vmul.f32 %v1365, %v1365
      %v1568 = vmul.f32 %v1370, %v1370
      %v1569 = vmul.f32 %v1373, %v1373
      %v1570 = vmul.f32 %v1378, %v1378
      %v1571 = vmul.f32 %v1381, %v1381
      %v1572 = vmul.f32 %v1386, %v1386
      %v1573 = vmul.f32 %v1389, %v1389
      %v1574 = vmul.f32 %v1394, %v1394
      %v1575 = vmul.f32 %v1397, %v1397
      %v1576 = vmul.f32 %v1402, %v1402
      %v1577 = vmul.f32 %v1405, %v1405
      %v1578 = vmul.f32 %v1410, %v1410
      %v1579 = vmul.f32 %v1413, %v1413
      %v1580 = vmul.f32 %v1418, %v1418
      %v1581 = vmul.f32 %v1421, %v1421
      %v1582 = vmul.f32 %v1426, %v1426
      %v1583 = vmul.f32 %v1429, %v1429
      %v1584 = vmul.f32 %v1434, %v1434
      %v1585 = vmul.f32 %v1437, %v1437
      %v1586 = vmul.f32 %v1442, %v1442
      %v1587 = vmul.f32 %v1445, %v1445
      %v1588 = vmul.f32 %v1450, %v1450
      %v1589 = vmul.f32 %v1453, %v1453
      %v1590 = vsel %vm1456, %v1558, 0.0
      %v1591 = vsel %vm1456, %v1559, 0.0
      %v1592 = vadd.f32 %v1590, %v1591
      %v1593 = vsel %vm1456, %v1560, 0.0
      %v1594 = vadd.f32 %v1592, %v1593
      %v1595 = vsel %vm1456, %v1561, 0.0
      %v1596 = vadd.f32 %v1594, %v1595
      %v1597 = vsel %vm1456, %v1562, 0.0
      %v1598 = vadd.f32 %v1596, %v1597
      %v1599 = vsel %vm1456, %v1563, 0.0
      %v1600 = vadd.f32 %v1598, %v1599
      %v1601 = vsel %vm1456, %v1564, 0.0
      %v1602 = vadd.f32 %v1600, %v1601
      %v1603 = vsel %vm1456, %v1565, 0.0
      %v1604 = vadd.f32 %v1602, %v1603
      %v1605 = vsel %vm1456, %v1566, 0.0
      %v1606 = vadd.f32 %v1604, %v1605
      %v1607 = vsel %vm1456, %v1567, 0.0
      %v1608 = vadd.f32 %v1606, %v1607
      %v1609 = vsel %vm1456, %v1568, 0.0
      %v1610 = vadd.f32 %v1608, %v1609
      %v1611 = vsel %vm1456, %v1569, 0.0
      %v1612 = vadd.f32 %v1610, %v1611
      %v1613 = vsel %vm1456, %v1570, 0.0
      %v1614 = vadd.f32 %v1612, %v1613
      %v1615 = vsel %vm1456, %v1571, 0.0
      %v1616 = vadd.f32 %v1614, %v1615
      %v1617 = vsel %vm1456, %v1572, 0.0
      %v1618 = vadd.f32 %v1616, %v1617
      %v1619 = vsel %vm1456, %v1573, 0.0
      %v1620 = vadd.f32 %v1618, %v1619
      %v1621 = vsel %vm1456, %v1574, 0.0
      %v1622 = vadd.f32 %v1620, %v1621
      %v1623 = vsel %vm1456, %v1575, 0.0
      %v1624 = vadd.f32 %v1622, %v1623
      %v1625 = vsel %vm1456, %v1576, 0.0
      %v1626 = vadd.f32 %v1624, %v1625
      %v1627 = vsel %vm1456, %v1577, 0.0
      %v1628 = vadd.f32 %v1626, %v1627
      %v1629 = vsel %vm1456, %v1578, 0.0
      %v1630 = vadd.f32 %v1628, %v1629
      %v1631 = vsel %vm1456, %v1579, 0.0
      %v1632 = vadd.f32 %v1630, %v1631
      %v1633 = vsel %vm1456, %v1580, 0.0
      %v1634 = vadd.f32 %v1632, %v1633
      %v1635 = vsel %vm1456, %v1581, 0.0
      %v1636 = vadd.f32 %v1634, %v1635
      %v1637 = vsel %vm1456, %v1582, 0.0
      %v1638 = vadd.f32 %v1636, %v1637
      %v1639 = vsel %vm1456, %v1583, 0.0
      %v1640 = vadd.f32 %v1638, %v1639
      %v1641 = vsel %vm1456, %v1584, 0.0
      %v1642 = vadd.f32 %v1640, %v1641
      %v1643 = vsel %vm1456, %v1585, 0.0
      %v1644 = vadd.f32 %v1642, %v1643
      %v1645 = vsel %vm1456, %v1586, 0.0
      %v1646 = vadd.f32 %v1644, %v1645
      %v1647 = vsel %vm1456, %v1587, 0.0
      %v1648 = vadd.f32 %v1646, %v1647
      %v1649 = vsel %vm1456, %v1588, 0.0
      %v1650 = vadd.f32 %v1648, %v1649
      %v1651 = vsel %vm1456, %v1589, 0.0
      %v1652 = vadd.f32 %v1650, %v1651
      %v1653 = vrot.slane %v1652, 4
      %v1654 = vadd.f32 %v1652, %v1653
      %v1655 = vrot.slane %v1654, 2
      %v1656 = vadd.f32 %v1654, %v1655
      %v1657 = vrot.slane %v1656, 1
      %v1658 = vadd.f32 %v1656, %v1657
      %vm1659 = vcmask 1040384
      %v1660 = vsel %vm1659, %v1557, %v1658
      %vm1661 = vcmask 58368
      %1662 = vst.msk [vmem:[%s181] sm:$0x3] %vm1661, %v1660
      %p1663 = scmp.lt.s32.totalorder %s15, 1
      %s1664 = scalar_select %p1663, %s15, 1
      %s1665 = smul.addr %s1664, 32
      %s1666 = smul.addr %s1665, 8
      %s1667 = scalar_lea.vmem %s2, %s1666
      %p1668 = scmp.lt.s32.totalorder %s15, 1
      %s1669 = scalar_select %p1668, %s15, 1
      %s1670 = smul.addr %s1669, 2
      %s1671 = scalar_lea.vmem %s3, %s1670
      // Predicated region
      $region29: #{vgg_block.2} parent=27 // pred_check
        %p1672 = pneg %p80
      $region30: #{vgg_block.2} parent=27 // pred_check_branch
        %1674 = sbr.rel (%p1672) target = $region32
      $region31: #{vgg_block.2} parent=27 // pred_region
        _
      $region32: #{vgg_block.2} parent=27 // pred_fallthru
        _
      // Predicated region
      $region33: #{vgg_block.2} parent=27 // pred_check
        %p1675 = pneg %p106
      $region34: #{vgg_block.2} parent=27 // pred_check_branch
        %1677 = sbr.rel (%p1675) target = $region36
      $region35: #{vgg_block.2} parent=27 // pred_region
        _
      $region36: #{vgg_block.2} parent=27 // pred_fallthru
        _
    $region28: #{vgg_block.2} parent=5 // pred_fallthru
      _
    %p1678 = scmp.le.s32.totalorder 2, %s10
    // Predicated region
    $region37: #{vgg_block.2} parent=5 // pred_check
      %p1679 = pneg %p1678
    $region38: #{vgg_block.2} parent=5 // pred_check_branch
      %1681 = sbr.rel (%p1679) target = $region40
    $region39: #{vgg_block.2} parent=5 // pred_region
      %s1682 = ssub.s32 %s10, 2
      // Predicated region
      $region41: #{vgg_block.2} parent=39 // pred_check
        %p1683 = pneg %p86
      $region42: #{vgg_block.2} parent=39 // pred_check_branch
        %1685 = sbr.rel (%p1683) target = $region44
      $region43: #{vgg_block.2} parent=39 // pred_region
        %p1686 = scmp.lt.s32.totalorder %s16, 1
        %s1687 = scalar_select %p1686, %s16, 1
        %s1688 = smul.addr %s1687, 32
        %s1689 = smul.addr %s1688, 8
        %s1690 = scalar_lea.vmem %s2, %s1689
      $region44: #{vgg_block.2} parent=39 // pred_fallthru
        _
      // Predicated region
      $region45: #{vgg_block.2} parent=39 // pred_check
        %p1691 = pneg %p112
      $region46: #{vgg_block.2} parent=39 // pred_check_branch
        %1693 = sbr.rel (%p1691) target = $region48
      $region47: #{vgg_block.2} parent=39 // pred_region
        %p1694 = scmp.lt.s32.totalorder %s16, 1
        %s1695 = scalar_select %p1694, %s16, 1
        %s1696 = smul.addr %s1695, 2
        %s1697 = scalar_lea.vmem %s3, %s1696
      $region48: #{vgg_block.2} parent=39 // pred_fallthru
        _
    $region40: #{vgg_block.2} parent=5 // pred_fallthru
      _
  $region6: #{vgg_block.2} parent=0 // loop_footer
    %s14 = sadd.s32 1, %s10
  $region7: #{vgg_block.2} parent=0 // loop_footer_branch
    %9 = sbr.rel target = $region3
  $region8: #{vgg_block.2} parent=0 // loop_exit
    _

</llo_original>
